<compile_context>
chip_gen: v6e
topology: v6e:2x2x1
jax: 0.10.0
libtpu: 0.0.40
codegen_flags: <defaults>
</compile_context>

<pallas_src>
import math

import jax
import jax.numpy as jnp
from jax.experimental import pallas as pl
from jax.experimental.pallas import tpu as pltpu

# ---------------- config (small, deterministic) ----------------
B = 2
C = 3
H = W = 16
PATCH = 4
N_PATCH = (H // PATCH) * (W // PATCH)      # 16 patches
N_TOK = N_PATCH + 1                        # +1 class token = 17 valid tokens
T_PAD = 32                                 # padded token count (sublane aligned)
D = 128                                    # hidden dim (lane-aligned)
NUM_HEADS = 2
HEAD_DIM = D // NUM_HEADS
MLP_HIDDEN = 4 * D
DEPTH = 3
N_LAST_BLOCKS = 2
LN_EPS = 1e-6
PATCH_K = C * PATCH * PATCH                # 48
K_PAD = 128                                # patch contraction dim padded to lane width
MASK_VAL = -1e30
VEC_ROWS = 16                              # packed small-param slab rows (multiple of 8)


# ---------------- in-kernel helpers (f32 element-wise math) ----------------
def _layernorm(x, g, b):
    mu = jnp.mean(x, axis=-1, keepdims=True)
    xc = x - mu
    var = jnp.mean(xc * xc, axis=-1, keepdims=True)
    inv = jax.lax.rsqrt(var + LN_EPS)
    return xc * inv * g + b


def _gelu_tanh(x):
    # TODO(synk): PyTorch nn.GELU defaults to the exact erf form; the tanh
    # approximation is used here for a clean EUP lowering (small numeric drift).
    c = math.sqrt(2.0 / math.pi)
    return 0.5 * x * (1.0 + jnp.tanh(c * (x + 0.044715 * x * x * x)))


# ---------------- fused ViT forward kernel (grid = (B, DEPTH)) ----------------
def fused_vit_kernel(p_ref, tok_ref, kb_ref, wpatch_ref,
                     wqkv_ref, wproj_ref, w1_ref, w2_ref,
                     vec_ref, bm1_ref, fnorm_ref, *rest):
    out_refs = rest[:N_LAST_BLOCKS]
    x_ref = rest[N_LAST_BLOCKS]          # VMEM scratch: activations for this image

    d = pl.program_id(1)

    # ---- depth step 0: patch embed (Conv2d(kernel=stride=PATCH) as matmul)
    # + token assembly. Patch rows are token-aligned and zero-padded host-side,
    # tok_ref already holds cls_token + pos_embed + conv bias on matching rows,
    # so one matmul + add builds x with no in-kernel concat/scatter.
    @pl.when(d == 0)
    def _():
        x_ref[...] = jnp.dot(p_ref[0].astype(jnp.bfloat16), wpatch_ref[...],
                             preferred_element_type=jnp.float32) + tok_ref[...]

    x = x_ref[...]                                      # [T_PAD, D] f32

    # packed per-block small params (all f32, lane-dense rows)
    vec = vec_ref[0]                                    # [VEC_ROWS, D]
    ln1g, ln1b = vec[0:1], vec[1:2]
    bq, bk, bv = vec[2:3], vec[3:4], vec[4:5]
    bproj = vec[5:6]
    ln2g, ln2b = vec[6:7], vec[7:8]
    bmlp2 = vec[8:9]

    # ---- attention ----
    h = _layernorm(x, ln1g, ln1b)
    # 1/sqrt(head_dim) is folded into the Q columns of wqkv/bq at prep time.
    qkv = jnp.dot(h.astype(jnp.bfloat16), wqkv_ref[0],
                  preferred_element_type=jnp.float32)   # [T_PAD, 3D]
    q = qkv[:, 0 * D:1 * D] + bq
    k = qkv[:, 1 * D:2 * D] + bk
    v = qkv[:, 2 * D:3 * D] + bv

    key_bias = kb_ref[...]                              # [T_PAD, T_PAD] (precomputed)

    head_outs = []
    for hh in range(NUM_HEADS):                         # static 2-iteration loop
        lo = hh * HEAD_DIM
        qh = q[:, lo:lo + HEAD_DIM].astype(jnp.bfloat16)
        kh = k[:, lo:lo + HEAD_DIM].astype(jnp.bfloat16)
        vh = v[:, lo:lo + HEAD_DIM].astype(jnp.bfloat16)
        s = jax.lax.dot_general(qh, kh, (((1,), (1,)), ((), ())),
                                preferred_element_type=jnp.float32)    # [T, T]
        s = s + key_bias
        s = s - jnp.max(s, axis=-1, keepdims=True)
        p = jnp.exp(s)
        p = p * pl.reciprocal(jnp.sum(p, axis=-1, keepdims=True), approx=True)
        head_outs.append(jnp.dot(p.astype(jnp.bfloat16), vh,
                                 preferred_element_type=jnp.float32))  # [T, Dh]
    attn = jnp.concatenate(head_outs, axis=-1)          # [T_PAD, D]
    attn = jnp.dot(attn.astype(jnp.bfloat16), wproj_ref[0],
                   preferred_element_type=jnp.float32) + bproj
    x = x + attn

    # ---- MLP ----
    h2 = _layernorm(x, ln2g, ln2b)
    m = jnp.dot(h2.astype(jnp.bfloat16), w1_ref[0],
                preferred_element_type=jnp.float32) + bm1_ref[0]
    m = _gelu_tanh(m)
    m = jnp.dot(m.astype(jnp.bfloat16), w2_ref[0],
                preferred_element_type=jnp.float32) + bmlp2
    x = x + m
    x_ref[...] = x

    # ---- fused final LayerNorm for the last N_LAST_BLOCKS outputs ----
    fn = fnorm_ref[...]                                 # [2, D]
    y = _layernorm(x, fn[0:1], fn[1:2])
    take_from = DEPTH - N_LAST_BLOCKS
    for j in range(N_LAST_BLOCKS):
        @pl.when(d == take_from + j)
        def _(j=j, y=y):
            out_refs[j][0] = y


def fused_forward(patches, prepared):
    inputs = (patches, prepared["tok_base"], prepared["key_bias"],
              prepared["w_patch"],
              prepared["w_qkv_all"], prepared["w_proj_all"],
              prepared["w_mlp1_all"], prepared["w_mlp2_all"],
              prepared["vec_all"], prepared["b_mlp1_all"], prepared["final_norm"])

    in_specs = [
        pl.BlockSpec((1, T_PAD, K_PAD), lambda b, d: (b, 0, 0)),     # patches (per image)
        pl.BlockSpec((T_PAD, D), lambda b, d: (0, 0)),               # tok_base (resident)
        pl.BlockSpec((T_PAD, T_PAD), lambda b, d: (0, 0)),           # key_bias (resident)
        pl.BlockSpec((K_PAD, D), lambda b, d: (0, 0)),               # w_patch (resident)
        # per-depth weight slabs: indexed by the depth grid axis -> auto
        # double-buffered (default Buffered(2)) behind the previous block.
        pl.BlockSpec((1, D, 3 * D), lambda b, d: (d, 0, 0)),
        pl.BlockSpec((1, D, D), lambda b, d: (d, 0, 0)),
        pl.BlockSpec((1, D, MLP_HIDDEN), lambda b, d: (d, 0, 0)),
        pl.BlockSpec((1, MLP_HIDDEN, D), lambda b, d: (d, 0, 0)),
        pl.BlockSpec((1, VEC_ROWS, D), lambda b, d: (d, 0, 0)),
        pl.BlockSpec((1, 1, MLP_HIDDEN), lambda b, d: (d, 0, 0)),
        pl.BlockSpec((2, D), lambda b, d: (0, 0)),                   # final norm g/b
    ]
    out_shape = tuple(jax.ShapeDtypeStruct((B, T_PAD, D), jnp.float32)
                      for _ in range(N_LAST_BLOCKS))
    out_specs = [pl.BlockSpec((1, T_PAD, D), lambda b, d: (b, 0, 0))
                 for _ in range(N_LAST_BLOCKS)]

    return pl.pallas_call(
        fused_vit_kernel,
        out_shape=out_shape,
        grid_spec=pltpu.PrefetchScalarGridSpec(
            num_scalar_prefetch=0,
            grid=(B, DEPTH),
            in_specs=in_specs,
            out_specs=out_specs,
            scratch_shapes=[pltpu.VMEM((T_PAD, D), jnp.float32)]),
        compiler_params=pltpu.CompilerParams(
            # batch axis parallel (uses both v7x TensorCores), depth sequential
            dimension_semantics=("parallel", "arbitrary"),
            # explicit VMEM budget (v7x-safe: well under the 64 MiB physical /
            # 32 MiB default scoped limit; ~0.8 MiB double-buffered here).
            vmem_limit_bytes=32 * 1024 * 1024),
    )(*inputs)


# ---------------- deterministic parameter init ----------------
def init_params(key):
    keys = iter(jax.random.split(key, 32))

    def nrm(shape, scale=0.02):
        return jax.random.normal(next(keys), shape, jnp.float32) * scale

    params = {
        "w_patch": nrm((PATCH_K, D)),
        "b_patch": jnp.zeros((1, D), jnp.float32),
        "cls_token": nrm((1, 1, D)),
        "pos_embed": nrm((1, N_TOK, D)),
        "norm_g": jnp.ones((1, D), jnp.float32),
        "norm_b": jnp.zeros((1, D), jnp.float32),
        "blocks": [],
    }
    for _ in range(DEPTH):
        params["blocks"].append({
            "ln1_g": jnp.ones((1, D), jnp.float32),
            "ln1_b": jnp.zeros((1, D), jnp.float32),
            "w_qkv": nrm((D, 3 * D)),
            "b_qkv": jnp.zeros((1, 3 * D), jnp.float32),
            "w_proj": nrm((D, D)),
            "b_proj": jnp.zeros((1, D), jnp.float32),
            "ln2_g": jnp.ones((1, D), jnp.float32),
            "ln2_b": jnp.zeros((1, D), jnp.float32),
            "w_mlp1": nrm((D, MLP_HIDDEN)),
            "b_mlp1": jnp.zeros((1, MLP_HIDDEN), jnp.float32),
            "w_mlp2": nrm((MLP_HIDDEN, D)),
            "b_mlp2": jnp.zeros((1, D), jnp.float32),
        })
    return params


def prepare_params(params):
    """One-time weight massaging into the fused-kernel layout:
      * zero-pad the patch-embed contraction dim 48 -> 128,
      * fold 1/sqrt(head_dim) into the Q columns of w_qkv / b_qkv,
      * fold cls_token + pos_embed + patch-embed bias into one token-base slab,
      * stack per-block matmul weights into [DEPTH, ...] bf16 slabs,
      * pack every (1, D) LN/bias row into one [DEPTH, 16, D] f32 slab
        (removes per-tensor (8,128) sublane-padding waste and DMA descriptors),
      * precompute the padded-key softmax bias."""
    f32, bf16 = jnp.float32, jnp.bfloat16

    w_patch = jnp.zeros((K_PAD, D), f32).at[:PATCH_K, :].set(params["w_patch"])

    tok = jnp.zeros((T_PAD, D), f32)
    tok = tok.at[0, :].set(params["cls_token"][0, 0] + params["pos_embed"][0, 0])
    tok = tok.at[1:N_TOK, :].set(params["pos_embed"][0, 1:] + params["b_patch"][0])

    scale = 1.0 / math.sqrt(HEAD_DIM)
    col_scale = jnp.concatenate(
        [jnp.full((1, D), scale, f32), jnp.ones((1, 2 * D), f32)], axis=1)

    wqkv_l, wproj_l, w1_l, w2_l, vec_l, bm1_l = [], [], [], [], [], []
    for blk in params["blocks"]:
        wqkv_l.append((blk["w_qkv"] * col_scale).astype(bf16))
        wproj_l.append(blk["w_proj"].astype(bf16))
        w1_l.append(blk["w_mlp1"].astype(bf16))
        w2_l.append(blk["w_mlp2"].astype(bf16))

        bqkv = blk["b_qkv"] * col_scale                  # (1, 3D), Q-scale folded
        vec = jnp.zeros((VEC_ROWS, D), f32)
        vec = vec.at[0].set(blk["ln1_g"][0])
        vec = vec.at[1].set(blk["ln1_b"][0])
        vec = vec.at[2].set(bqkv[0, 0:D])
        vec = vec.at[3].set(bqkv[0, D:2 * D])
        vec = vec.at[4].set(bqkv[0, 2 * D:3 * D])
        vec = vec.at[5].set(blk["b_proj"][0])
        vec = vec.at[6].set(blk["ln2_g"][0])
        vec = vec.at[7].set(blk["ln2_b"][0])
        vec = vec.at[8].set(blk["b_mlp2"][0])
        vec_l.append(vec)
        bm1_l.append(blk["b_mlp1"])                      # (1, MLP_HIDDEN)

    # key-side softmax mask for padded token columns (valid query rows exact;
    # padded query rows are sliced away on the host).
    key_row = jnp.where(jnp.arange(T_PAD) < N_TOK, 0.0, MASK_VAL).astype(f32)
    key_bias = jnp.tile(key_row[None, :], (T_PAD, 1))

    return {
        "w_patch": w_patch.astype(bf16),
        "tok_base": tok,
        "key_bias": key_bias,
        "w_qkv_all": jnp.stack(wqkv_l),                  # (DEPTH, D, 3D) bf16
        "w_proj_all": jnp.stack(wproj_l),                # (DEPTH, D, D)  bf16
        "w_mlp1_all": jnp.stack(w1_l),                   # (DEPTH, D, 4D) bf16
        "w_mlp2_all": jnp.stack(w2_l),                   # (DEPTH, 4D, D) bf16
        "vec_all": jnp.stack(vec_l),                     # (DEPTH, 16, D) f32
        "b_mlp1_all": jnp.stack(bm1_l),                  # (DEPTH, 1, 4D) f32
        "final_norm": jnp.concatenate([params["norm_g"], params["norm_b"]], 0),
    }


# ---------------- forward: get_intermediate_layers semantics ----------------
def model_with_intermediate_layers(images, prepared):
    """Returns a tuple over the last N_LAST_BLOCKS of (patch_tokens, class_token),
    both passed through the final LayerNorm — matching DINOv2's
    get_intermediate_layers(..., return_class_token=True, norm=True)."""
    b = images.shape[0]
    nH, nW = H // PATCH, W // PATCH

    # Conv2d(kernel=stride=PATCH) patch extraction in (C, ph, pw) order, laid
    # out token-aligned + zero-padded so the kernel needs no concat/scatter.
    patches = images.reshape(b, C, nH, PATCH, nW, PATCH)
    patches = patches.transpose(0, 2, 4, 1, 3, 5).reshape(b, N_PATCH, PATCH_K)
    patches = jnp.pad(patches,
                      ((0, 0), (1, T_PAD - 1 - N_PATCH), (0, K_PAD - PATCH_K)))

    outs = fused_forward(patches, prepared)

    feats = []
    for o in outs:                                       # (B, T_PAD, D)
        feats.append((o[:, 1:N_TOK, :], o[:, 0, :]))
    # NOTE: torch.inference_mode()/autocast_ctx are framework contexts with no
    # numerical effect here; matmuls use bf16 operands with f32 accumulation.
    return tuple(feats)


if __name__ == "__main__":
    key = jax.random.PRNGKey(0)
    pkey, xkey = jax.random.split(key)
    params = init_params(pkey)
    prepared = prepare_params(params)          # one-time weight prep, outside jit
    images = jax.random.normal(xkey, (B, C, H, W), jnp.float32)

    fwd = jax.jit(model_with_intermediate_layers)
    features = fwd(images, prepared)
    jax.block_until_ready(features)

    assert len(features) == N_LAST_BLOCKS
    for patch_tok, cls_tok in features:
        assert patch_tok.shape == (B, N_PATCH, D)
        assert cls_tok.shape == (B, D)
        assert bool(jnp.all(jnp.isfinite(patch_tok)))
        assert bool(jnp.all(jnp.isfinite(cls_tok)))
    print("KERNEL_OK")
</pallas_src>

<mosaic_0001>
module attributes {stable_mosaic.version = 11 : i64} {
  func.func @fused_vit_kernel(%arg0: i32, %arg1: i32, %arg2: memref<1x32x128xf32, #tpu.memory_space<vmem>>, %arg3: memref<32x128xf32, #tpu.memory_space<vmem>>, %arg4: memref<32x32xf32, #tpu.memory_space<vmem>>, %arg5: memref<128x128xbf16, #tpu.memory_space<vmem>>, %arg6: memref<1x128x384xbf16, #tpu.memory_space<vmem>>, %arg7: memref<1x128x128xbf16, #tpu.memory_space<vmem>>, %arg8: memref<1x128x512xbf16, #tpu.memory_space<vmem>>, %arg9: memref<1x512x128xbf16, #tpu.memory_space<vmem>>, %arg10: memref<1x16x128xf32, #tpu.memory_space<vmem>>, %arg11: memref<1x1x512xf32, #tpu.memory_space<vmem>>, %arg12: memref<2x128xf32, #tpu.memory_space<vmem>>, %arg13: memref<1x32x128xf32, #tpu.memory_space<vmem>>, %arg14: memref<1x32x128xf32, #tpu.memory_space<vmem>>, %arg15: memref<32x128xf32, #tpu.memory_space<vmem>>) attributes {dimension_semantics = [#tpu.dimension_semantics<parallel>, #tpu.dimension_semantics<arbitrary>], iteration_bounds = array<i64: 2, 3>, scalar_prefetch = 0 : i64, scratch_operands = 1 : i64, tpu.core_type = #tpu.core_type<tc>, window_params = [{transform_indices = @transform_0, window_bounds = array<i64: 1, 32, 128>}, {pipeline_mode = #tpu.pipeline_mode<synchronous>, transform_indices = @transform_1, window_bounds = array<i64: 32, 128>}, {pipeline_mode = #tpu.pipeline_mode<synchronous>, transform_indices = @transform_2, window_bounds = array<i64: 32, 32>}, {pipeline_mode = #tpu.pipeline_mode<synchronous>, transform_indices = @transform_3, window_bounds = array<i64: 128, 128>}, {transform_indices = @transform_4, window_bounds = array<i64: 1, 128, 384>}, {transform_indices = @transform_5, window_bounds = array<i64: 1, 128, 128>}, {transform_indices = @transform_6, window_bounds = array<i64: 1, 128, 512>}, {transform_indices = @transform_7, window_bounds = array<i64: 1, 512, 128>}, {transform_indices = @transform_8, window_bounds = array<i64: 1, 16, 128>}, {transform_indices = @transform_9, window_bounds = array<i64: 1, 1, 512>}, {pipeline_mode = #tpu.pipeline_mode<synchronous>, transform_indices = @transform_10, window_bounds = array<i64: 2, 128>}, {transform_indices = @transform_11, window_bounds = array<i64: 1, 32, 128>}, {transform_indices = @transform_12, window_bounds = array<i64: 1, 32, 128>}]} {
    %c0_i32 = arith.constant 0 : i32
    %0 = arith.cmpi eq, %arg1, %c0_i32 : i32
    %1 = arith.extui %0 : i1 to i32
    %c0_i32_0 = arith.constant 0 : i32
    %2 = arith.cmpi ne, %1, %c0_i32_0 : i32
    scf.if %2 {
      %c0_58 = arith.constant 0 : index
      %c0_59 = arith.constant 0 : index
      %c0_60 = arith.constant 0 : index
      %175 = vector.load %arg2[%c0_58, %c0_59, %c0_60] : memref<1x32x128xf32, #tpu.memory_space<vmem>>, vector<1x32x128xf32>
      %176 = vector.shape_cast %175 : vector<1x32x128xf32> to vector<32x128xf32>
      %177 = arith.truncf %176 : vector<32x128xf32> to vector<32x128xbf16>
      %c0_61 = arith.constant 0 : index
      %c0_62 = arith.constant 0 : index
      %178 = vector.load %arg5[%c0_61, %c0_62] : memref<128x128xbf16, #tpu.memory_space<vmem>>, vector<128x128xbf16>
      %cst_63 = arith.constant dense<0.000000e+00> : vector<32x128xf32>
      %179 = tpu.matmul %177, %178, %cst_63 {dimension_numbers = #tpu.dot_dimension_numbers<[1], [0], [0], [1], [0, 0, 1, 1], [], []>} : vector<32x128xbf16>, vector<128x128xbf16>, vector<32x128xf32> -> vector<32x128xf32>
      %c0_64 = arith.constant 0 : index
      %c0_65 = arith.constant 0 : index
      %180 = vector.load %arg3[%c0_64, %c0_65] : memref<32x128xf32, #tpu.memory_space<vmem>>, vector<32x128xf32>
      %181 = arith.addf %179, %180 : vector<32x128xf32>
      %c0_66 = arith.constant 0 : index
      %c0_67 = arith.constant 0 : index
      %182 = vector.load %arg15[%c0_66, %c0_67] : memref<32x128xf32, #tpu.memory_space<vmem>>, vector<32x128xf32>
      tpu.vector_store %arg15[%c0_66, %c0_67], %181 {strides = array<i32>} : memref<32x128xf32, #tpu.memory_space<vmem>>, vector<32x128xf32>,
    } else {
    }
    %c0 = arith.constant 0 : index
    %c0_1 = arith.constant 0 : index
    %3 = vector.load %arg15[%c0, %c0_1] : memref<32x128xf32, #tpu.memory_space<vmem>>, vector<32x128xf32>
    %c0_2 = arith.constant 0 : index
    %c0_3 = arith.constant 0 : index
    %c0_4 = arith.constant 0 : index
    %4 = vector.load %arg10[%c0_2, %c0_3, %c0_4] : memref<1x16x128xf32, #tpu.memory_space<vmem>>, vector<1x16x128xf32>
    %5 = vector.shape_cast %4 : vector<1x16x128xf32> to vector<16x128xf32>
    %6 = vector.extract_strided_slice %5 {offsets = [0, 0], sizes = [1, 128], strides = [1, 1]} : vector<16x128xf32> to vector<1x128xf32>
    %7 = vector.extract_strided_slice %5 {offsets = [1, 0], sizes = [1, 128], strides = [1, 1]} : vector<16x128xf32> to vector<1x128xf32>
    %8 = vector.extract_strided_slice %5 {offsets = [2, 0], sizes = [1, 128], strides = [1, 1]} : vector<16x128xf32> to vector<1x128xf32>
    %9 = vector.extract_strided_slice %5 {offsets = [3, 0], sizes = [1, 128], strides = [1, 1]} : vector<16x128xf32> to vector<1x128xf32>
    %10 = vector.extract_strided_slice %5 {offsets = [4, 0], sizes = [1, 128], strides = [1, 1]} : vector<16x128xf32> to vector<1x128xf32>
    %11 = vector.extract_strided_slice %5 {offsets = [5, 0], sizes = [1, 128], strides = [1, 1]} : vector<16x128xf32> to vector<1x128xf32>
    %12 = vector.extract_strided_slice %5 {offsets = [6, 0], sizes = [1, 128], strides = [1, 1]} : vector<16x128xf32> to vector<1x128xf32>
    %13 = vector.extract_strided_slice %5 {offsets = [7, 0], sizes = [1, 128], strides = [1, 1]} : vector<16x128xf32> to vector<1x128xf32>
    %14 = vector.extract_strided_slice %5 {offsets = [8, 0], sizes = [1, 128], strides = [1, 1]} : vector<16x128xf32> to vector<1x128xf32>
    %cst = arith.constant dense<0.000000e+00> : vector<32xf32>
    %15 = vector.multi_reduction <add>, %3, %cst [1] : vector<32x128xf32> to vector<32xf32>
    %16 = vector.shape_cast %15 : vector<32xf32> to vector<32x1xf32>
    %cst_5 = arith.constant 1.280000e+02 : f32
    %17 = vector.broadcast %cst_5 : f32 to vector<32x1xf32>
    %18 = arith.divf %16, %17 : vector<32x1xf32>
    %19 = vector.broadcast %18 : vector<32x1xf32> to vector<32x128xf32>
    %20 = arith.subf %3, %19 : vector<32x128xf32>
    %21 = arith.mulf %20, %20 : vector<32x128xf32>
    %cst_6 = arith.constant dense<0.000000e+00> : vector<32xf32>
    %22 = vector.multi_reduction <add>, %21, %cst_6 [1] : vector<32x128xf32> to vector<32xf32>
    %23 = vector.shape_cast %22 : vector<32xf32> to vector<32x1xf32>
    %cst_7 = arith.constant 1.280000e+02 : f32
    %24 = vector.broadcast %cst_7 : f32 to vector<32x1xf32>
    %25 = arith.divf %23, %24 : vector<32x1xf32>
    %cst_8 = arith.constant 9.99999997E-7 : f32
    %26 = vector.broadcast %cst_8 : f32 to vector<32x1xf32>
    %27 = arith.addf %25, %26 : vector<32x1xf32>
    %28 = math.rsqrt %27 : vector<32x1xf32>
    %29 = vector.broadcast %28 : vector<32x1xf32> to vector<32x128xf32>
    %30 = arith.mulf %20, %29 : vector<32x128xf32>
    %31 = vector.broadcast %6 : vector<1x128xf32> to vector<32x128xf32>
    %32 = arith.mulf %30, %31 : vector<32x128xf32>
    %33 = vector.broadcast %7 : vector<1x128xf32> to vector<32x128xf32>
    %34 = arith.addf %32, %33 : vector<32x128xf32>
    %35 = arith.truncf %34 : vector<32x128xf32> to vector<32x128xbf16>
    %c0_9 = arith.constant 0 : index
    %c0_10 = arith.constant 0 : index
    %c0_11 = arith.constant 0 : index
    %36 = vector.load %arg6[%c0_9, %c0_10, %c0_11] : memref<1x128x384xbf16, #tpu.memory_space<vmem>>, vector<1x128x384xbf16>
    %37 = vector.shape_cast %36 : vector<1x128x384xbf16> to vector<128x384xbf16>
    %cst_12 = arith.constant dense<0.000000e+00> : vector<32x384xf32>
    %38 = tpu.matmul %35, %37, %cst_12 {dimension_numbers = #tpu.dot_dimension_numbers<[1], [0], [0], [1], [0, 0, 1, 1], [], []>} : vector<32x128xbf16>, vector<128x384xbf16>, vector<32x384xf32> -> vector<32x384xf32>
    %39 = vector.extract_strided_slice %38 {offsets = [0, 0], sizes = [32, 128], strides = [1, 1]} : vector<32x384xf32> to vector<32x128xf32>
    %40 = vector.broadcast %8 : vector<1x128xf32> to vector<32x128xf32>
    %41 = arith.addf %39, %40 : vector<32x128xf32>
    %42 = vector.extract_strided_slice %38 {offsets = [0, 128], sizes = [32, 128], strides = [1, 1]} : vector<32x384xf32> to vector<32x128xf32>
    %43 = vector.broadcast %9 : vector<1x128xf32> to vector<32x128xf32>
    %44 = arith.addf %42, %43 : vector<32x128xf32>
    %45 = vector.extract_strided_slice %38 {offsets = [0, 256], sizes = [32, 128], strides = [1, 1]} : vector<32x384xf32> to vector<32x128xf32>
    %46 = vector.broadcast %10 : vector<1x128xf32> to vector<32x128xf32>
    %47 = arith.addf %45, %46 : vector<32x128xf32>
    %c0_13 = arith.constant 0 : index
    %c0_14 = arith.constant 0 : index
    %48 = vector.load %arg4[%c0_13, %c0_14] : memref<32x32xf32, #tpu.memory_space<vmem>>, vector<32x32xf32>
    %49 = vector.extract_strided_slice %41 {offsets = [0, 0], sizes = [32, 64], strides = [1, 1]} : vector<32x128xf32> to vector<32x64xf32>
    %50 = arith.truncf %49 : vector<32x64xf32> to vector<32x64xbf16>
    %51 = vector.extract_strided_slice %44 {offsets = [0, 0], sizes = [32, 64], strides = [1, 1]} : vector<32x128xf32> to vector<32x64xf32>
    %52 = arith.truncf %51 : vector<32x64xf32> to vector<32x64xbf16>
    %53 = vector.extract_strided_slice %47 {offsets = [0, 0], sizes = [32, 64], strides = [1, 1]} : vector<32x128xf32> to vector<32x64xf32>
    %54 = arith.truncf %53 : vector<32x64xf32> to vector<32x64xbf16>
    %cst_15 = arith.constant dense<0.000000e+00> : vector<32x32xf32>
    %55 = tpu.matmul %50, %52, %cst_15 {dimension_numbers = #tpu.dot_dimension_numbers<[1], [1], [0], [0], [0, 0, 1, 0], [], []>} : vector<32x64xbf16>, vector<32x64xbf16>, vector<32x32xf32> -> vector<32x32xf32>
    %56 = arith.addf %55, %48 : vector<32x32xf32>
    %cst_16 = arith.constant dense<0xFF800000> : vector<32xf32>
    %57 = vector.multi_reduction <maximumf>, %56, %cst_16 [1] : vector<32x32xf32> to vector<32xf32>
    %58 = vector.shape_cast %57 : vector<32xf32> to vector<32x1xf32>
    %59 = vector.broadcast %58 : vector<32x1xf32> to vector<32x32xf32>
    %60 = arith.subf %56, %59 : vector<32x32xf32>
    %61 = math.exp %60 : vector<32x32xf32>
    %cst_17 = arith.constant dense<0.000000e+00> : vector<32xf32>
    %62 = vector.multi_reduction <add>, %61, %cst_17 [1] : vector<32x32xf32> to vector<32xf32>
    %63 = vector.shape_cast %62 : vector<32xf32> to vector<32x1xf32>
    %64 = tpu.reciprocal %63 {approx = true} : vector<32x1xf32> -> vector<32x1xf32>
    %65 = vector.broadcast %64 : vector<32x1xf32> to vector<32x32xf32>
    %66 = arith.mulf %61, %65 : vector<32x32xf32>
    %67 = arith.truncf %66 : vector<32x32xf32> to vector<32x32xbf16>
    %cst_18 = arith.constant dense<0.000000e+00> : vector<32x64xf32>
    %68 = tpu.matmul %67, %54, %cst_18 {dimension_numbers = #tpu.dot_dimension_numbers<[1], [0], [0], [1], [0, 0, 1, 1], [], []>} : vector<32x32xbf16>, vector<32x64xbf16>, vector<32x64xf32> -> vector<32x64xf32>
    %69 = vector.extract_strided_slice %41 {offsets = [0, 64], sizes = [32, 64], strides = [1, 1]} : vector<32x128xf32> to vector<32x64xf32>
    %70 = arith.truncf %69 : vector<32x64xf32> to vector<32x64xbf16>
    %71 = vector.extract_strided_slice %44 {offsets = [0, 64], sizes = [32, 64], strides = [1, 1]} : vector<32x128xf32> to vector<32x64xf32>
    %72 = arith.truncf %71 : vector<32x64xf32> to vector<32x64xbf16>
    %73 = vector.extract_strided_slice %47 {offsets = [0, 64], sizes = [32, 64], strides = [1, 1]} : vector<32x128xf32> to vector<32x64xf32>
    %74 = arith.truncf %73 : vector<32x64xf32> to vector<32x64xbf16>
    %cst_19 = arith.constant dense<0.000000e+00> : vector<32x32xf32>
    %75 = tpu.matmul %70, %72, %cst_19 {dimension_numbers = #tpu.dot_dimension_numbers<[1], [1], [0], [0], [0, 0, 1, 0], [], []>} : vector<32x64xbf16>, vector<32x64xbf16>, vector<32x32xf32> -> vector<32x32xf32>
    %76 = arith.addf %75, %48 : vector<32x32xf32>
    %cst_20 = arith.constant dense<0xFF800000> : vector<32xf32>
    %77 = vector.multi_reduction <maximumf>, %76, %cst_20 [1] : vector<32x32xf32> to vector<32xf32>
    %78 = vector.shape_cast %77 : vector<32xf32> to vector<32x1xf32>
    %79 = vector.broadcast %78 : vector<32x1xf32> to vector<32x32xf32>
    %80 = arith.subf %76, %79 : vector<32x32xf32>
    %81 = math.exp %80 : vector<32x32xf32>
    %cst_21 = arith.constant dense<0.000000e+00> : vector<32xf32>
    %82 = vector.multi_reduction <add>, %81, %cst_21 [1] : vector<32x32xf32> to vector<32xf32>
    %83 = vector.shape_cast %82 : vector<32xf32> to vector<32x1xf32>
    %84 = tpu.reciprocal %83 {approx = true} : vector<32x1xf32> -> vector<32x1xf32>
    %85 = vector.broadcast %84 : vector<32x1xf32> to vector<32x32xf32>
    %86 = arith.mulf %81, %85 : vector<32x32xf32>
    %87 = arith.truncf %86 : vector<32x32xf32> to vector<32x32xbf16>
    %cst_22 = arith.constant dense<0.000000e+00> : vector<32x64xf32>
    %88 = tpu.matmul %87, %74, %cst_22 {dimension_numbers = #tpu.dot_dimension_numbers<[1], [0], [0], [1], [0, 0, 1, 1], [], []>} : vector<32x32xbf16>, vector<32x64xbf16>, vector<32x64xf32> -> vector<32x64xf32>
    %89 = tpu.concatenate %68, %88 in 1 : vector<32x64xf32>, vector<32x64xf32> -> vector<32x128xf32>
    %90 = arith.truncf %89 : vector<32x128xf32> to vector<32x128xbf16>
    %c0_23 = arith.constant 0 : index
    %c0_24 = arith.constant 0 : index
    %c0_25 = arith.constant 0 : index
    %91 = vector.load %arg7[%c0_23, %c0_24, %c0_25] : memref<1x128x128xbf16, #tpu.memory_space<vmem>>, vector<1x128x128xbf16>
    %92 = vector.shape_cast %91 : vector<1x128x128xbf16> to vector<128x128xbf16>
    %cst_26 = arith.constant dense<0.000000e+00> : vector<32x128xf32>
    %93 = tpu.matmul %90, %92, %cst_26 {dimension_numbers = #tpu.dot_dimension_numbers<[1], [0], [0], [1], [0, 0, 1, 1], [], []>} : vector<32x128xbf16>, vector<128x128xbf16>, vector<32x128xf32> -> vector<32x128xf32>
    %94 = vector.broadcast %11 : vector<1x128xf32> to vector<32x128xf32>
    %95 = arith.addf %93, %94 : vector<32x128xf32>
    %96 = arith.addf %3, %95 : vector<32x128xf32>
    %cst_27 = arith.constant dense<0.000000e+00> : vector<32xf32>
    %97 = vector.multi_reduction <add>, %96, %cst_27 [1] : vector<32x128xf32> to vector<32xf32>
    %98 = vector.shape_cast %97 : vector<32xf32> to vector<32x1xf32>
    %cst_28 = arith.constant 1.280000e+02 : f32
    %99 = vector.broadcast %cst_28 : f32 to vector<32x1xf32>
    %100 = arith.divf %98, %99 : vector<32x1xf32>
    %101 = vector.broadcast %100 : vector<32x1xf32> to vector<32x128xf32>
    %102 = arith.subf %96, %101 : vector<32x128xf32>
    %103 = arith.mulf %102, %102 : vector<32x128xf32>
    %cst_29 = arith.constant dense<0.000000e+00> : vector<32xf32>
    %104 = vector.multi_reduction <add>, %103, %cst_29 [1] : vector<32x128xf32> to vector<32xf32>
    %105 = vector.shape_cast %104 : vector<32xf32> to vector<32x1xf32>
    %cst_30 = arith.constant 1.280000e+02 : f32
    %106 = vector.broadcast %cst_30 : f32 to vector<32x1xf32>
    %107 = arith.divf %105, %106 : vector<32x1xf32>
    %cst_31 = arith.constant 9.99999997E-7 : f32
    %108 = vector.broadcast %cst_31 : f32 to vector<32x1xf32>
    %109 = arith.addf %107, %108 : vector<32x1xf32>
    %110 = math.rsqrt %109 : vector<32x1xf32>
    %111 = vector.broadcast %110 : vector<32x1xf32> to vector<32x128xf32>
    %112 = arith.mulf %102, %111 : vector<32x128xf32>
    %113 = vector.broadcast %12 : vector<1x128xf32> to vector<32x128xf32>
    %114 = arith.mulf %112, %113 : vector<32x128xf32>
    %115 = vector.broadcast %13 : vector<1x128xf32> to vector<32x128xf32>
    %116 = arith.addf %114, %115 : vector<32x128xf32>
    %117 = arith.truncf %116 : vector<32x128xf32> to vector<32x128xbf16>
    %c0_32 = arith.constant 0 : index
    %c0_33 = arith.constant 0 : index
    %c0_34 = arith.constant 0 : index
    %118 = vector.load %arg8[%c0_32, %c0_33, %c0_34] : memref<1x128x512xbf16, #tpu.memory_space<vmem>>, vector<1x128x512xbf16>
    %119 = vector.shape_cast %118 : vector<1x128x512xbf16> to vector<128x512xbf16>
    %cst_35 = arith.constant dense<0.000000e+00> : vector<32x512xf32>
    %120 = tpu.matmul %117, %119, %cst_35 {dimension_numbers = #tpu.dot_dimension_numbers<[1], [0], [0], [1], [0, 0, 1, 1], [], []>} : vector<32x128xbf16>, vector<128x512xbf16>, vector<32x512xf32> -> vector<32x512xf32>
    %c0_36 = arith.constant 0 : index
    %c0_37 = arith.constant 0 : index
    %c0_38 = arith.constant 0 : index
    %121 = vector.load %arg11[%c0_36, %c0_37, %c0_38] : memref<1x1x512xf32, #tpu.memory_space<vmem>>, vector<1x1x512xf32>
    %122 = vector.shape_cast %121 : vector<1x1x512xf32> to vector<1x512xf32>
    %123 = vector.broadcast %122 : vector<1x512xf32> to vector<32x512xf32>
    %124 = arith.addf %120, %123 : vector<32x512xf32>
    %cst_39 = arith.constant 5.000000e-01 : f32
    %125 = vector.broadcast %cst_39 : f32 to vector<32x512xf32>
    %126 = arith.mulf %125, %124 : vector<32x512xf32>
    %cst_40 = arith.constant 4.471500e-02 : f32
    %127 = vector.broadcast %cst_40 : f32 to vector<32x512xf32>
    %128 = arith.mulf %127, %124 : vector<32x512xf32>
    %129 = arith.mulf %128, %124 : vector<32x512xf32>
    %130 = arith.mulf %129, %124 : vector<32x512xf32>
    %131 = arith.addf %124, %130 : vector<32x512xf32>
    %cst_41 = arith.constant 0.797884583 : f32
    %132 = vector.broadcast %cst_41 : f32 to vector<32x512xf32>
    %133 = arith.mulf %132, %131 : vector<32x512xf32>
    %134 = math.tanh %133 : vector<32x512xf32>
    %cst_42 = arith.constant 1.000000e+00 : f32
    %135 = vector.broadcast %cst_42 : f32 to vector<32x512xf32>
    %136 = arith.addf %135, %134 : vector<32x512xf32>
    %137 = arith.mulf %126, %136 : vector<32x512xf32>
    %138 = arith.truncf %137 : vector<32x512xf32> to vector<32x512xbf16>
    %c0_43 = arith.constant 0 : index
    %c0_44 = arith.constant 0 : index
    %c0_45 = arith.constant 0 : index
    %139 = vector.load %arg9[%c0_43, %c0_44, %c0_45] : memref<1x512x128xbf16, #tpu.memory_space<vmem>>, vector<1x512x128xbf16>
    %140 = vector.shape_cast %139 : vector<1x512x128xbf16> to vector<512x128xbf16>
    %cst_46 = arith.constant dense<0.000000e+00> : vector<32x128xf32>
    %141 = tpu.matmul %138, %140, %cst_46 {dimension_numbers = #tpu.dot_dimension_numbers<[1], [0], [0], [1], [0, 0, 1, 1], [], []>} : vector<32x512xbf16>, vector<512x128xbf16>, vector<32x128xf32> -> vector<32x128xf32>
    %142 = vector.broadcast %14 : vector<1x128xf32> to vector<32x128xf32>
    %143 = arith.addf %141, %142 : vector<32x128xf32>
    %144 = arith.addf %96, %143 : vector<32x128xf32>
    %c0_47 = arith.constant 0 : index
    %c0_48 = arith.constant 0 : index
    %145 = vector.load %arg15[%c0_47, %c0_48] : memref<32x128xf32, #tpu.memory_space<vmem>>, vector<32x128xf32>
    tpu.vector_store %arg15[%c0_47, %c0_48], %144 {strides = array<i32>} : memref<32x128xf32, #tpu.memory_space<vmem>>, vector<32x128xf32>,
    %c0_49 = arith.constant 0 : index
    %c0_50 = arith.constant 0 : index
    %146 = vector.load %arg12[%c0_49, %c0_50] : memref<2x128xf32, #tpu.memory_space<vmem>>, vector<2x128xf32>
    %147 = vector.extract_strided_slice %146 {offsets = [0, 0], sizes = [1, 128], strides = [1, 1]} : vector<2x128xf32> to vector<1x128xf32>
    %148 = vector.extract_strided_slice %146 {offsets = [1, 0], sizes = [1, 128], strides = [1, 1]} : vector<2x128xf32> to vector<1x128xf32>
    %cst_51 = arith.constant dense<0.000000e+00> : vector<32xf32>
    %149 = vector.multi_reduction <add>, %144, %cst_51 [1] : vector<32x128xf32> to vector<32xf32>
    %150 = vector.shape_cast %149 : vector<32xf32> to vector<32x1xf32>
    %cst_52 = arith.constant 1.280000e+02 : f32
    %151 = vector.broadcast %cst_52 : f32 to vector<32x1xf32>
    %152 = arith.divf %150, %151 : vector<32x1xf32>
    %153 = vector.broadcast %152 : vector<32x1xf32> to vector<32x128xf32>
    %154 = arith.subf %144, %153 : vector<32x128xf32>
    %155 = arith.mulf %154, %154 : vector<32x128xf32>
    %cst_53 = arith.constant dense<0.000000e+00> : vector<32xf32>
    %156 = vector.multi_reduction <add>, %155, %cst_53 [1] : vector<32x128xf32> to vector<32xf32>
    %157 = vector.shape_cast %156 : vector<32xf32> to vector<32x1xf32>
    %cst_54 = arith.constant 1.280000e+02 : f32
    %158 = vector.broadcast %cst_54 : f32 to vector<32x1xf32>
    %159 = arith.divf %157, %158 : vector<32x1xf32>
    %cst_55 = arith.constant 9.99999997E-7 : f32
    %160 = vector.broadcast %cst_55 : f32 to vector<32x1xf32>
    %161 = arith.addf %159, %160 : vector<32x1xf32>
    %162 = math.rsqrt %161 : vector<32x1xf32>
    %163 = vector.broadcast %162 : vector<32x1xf32> to vector<32x128xf32>
    %164 = arith.mulf %154, %163 : vector<32x128xf32>
    %165 = vector.broadcast %147 : vector<1x128xf32> to vector<32x128xf32>
    %166 = arith.mulf %164, %165 : vector<32x128xf32>
    %167 = vector.broadcast %148 : vector<1x128xf32> to vector<32x128xf32>
    %168 = arith.addf %166, %167 : vector<32x128xf32>
    %c1_i32 = arith.constant 1 : i32
    %169 = arith.cmpi eq, %arg1, %c1_i32 : i32
    %170 = arith.extui %169 : i1 to i32
    %c0_i32_56 = arith.constant 0 : i32
    %171 = arith.cmpi ne, %170, %c0_i32_56 : i32
    scf.if %171 {
      %c0_58 = arith.constant 0 : index
      %c0_59 = arith.constant 0 : index
      %c0_60 = arith.constant 0 : index
      %175 = vector.load %arg13[%c0_58, %c0_59, %c0_60] : memref<1x32x128xf32, #tpu.memory_space<vmem>>, vector<1x32x128xf32>
      %176 = vector.shape_cast %175 : vector<1x32x128xf32> to vector<32x128xf32>
      %177 = vector.shape_cast %168 : vector<32x128xf32> to vector<1x32x128xf32>
      tpu.vector_store %arg13[%c0_58, %c0_59, %c0_60], %177 {strides = array<i32>} : memref<1x32x128xf32, #tpu.memory_space<vmem>>, vector<1x32x128xf32>,
    } else {
    }
    %c2_i32 = arith.constant 2 : i32
    %172 = arith.cmpi eq, %arg1, %c2_i32 : i32
    %173 = arith.extui %172 : i1 to i32
    %c0_i32_57 = arith.constant 0 : i32
    %174 = arith.cmpi ne, %173, %c0_i32_57 : i32
    scf.if %174 {
      %c0_58 = arith.constant 0 : index
      %c0_59 = arith.constant 0 : index
      %c0_60 = arith.constant 0 : index
      %175 = vector.load %arg14[%c0_58, %c0_59, %c0_60] : memref<1x32x128xf32, #tpu.memory_space<vmem>>, vector<1x32x128xf32>
      %176 = vector.shape_cast %175 : vector<1x32x128xf32> to vector<32x128xf32>
      %177 = vector.shape_cast %168 : vector<32x128xf32> to vector<1x32x128xf32>
      tpu.vector_store %arg14[%c0_58, %c0_59, %c0_60], %177 {strides = array<i32>} : memref<1x32x128xf32, #tpu.memory_space<vmem>>, vector<1x32x128xf32>,
    } else {
    }
    return
  }
  func.func @transform_0(%arg0: i32, %arg1: i32) -> (i32, i32, i32) {
    %c0_i32 = arith.constant 0 : i32
    %c0_i32_0 = arith.constant 0 : i32
    %c0_i32_1 = arith.constant 0 : i32
    return %arg0, %c0_i32, %c0_i32_0 : i32, i32, i32
  }
  func.func @transform_1(%arg0: i32, %arg1: i32) -> (i32, i32) {
    %c0_i32 = arith.constant 0 : i32
    %c0_i32_0 = arith.constant 0 : i32
    %c0_i32_1 = arith.constant 0 : i32
    return %c0_i32, %c0_i32_0 : i32, i32
  }
  func.func @transform_2(%arg0: i32, %arg1: i32) -> (i32, i32) {
    %c0_i32 = arith.constant 0 : i32
    %c0_i32_0 = arith.constant 0 : i32
    %c0_i32_1 = arith.constant 0 : i32
    return %c0_i32, %c0_i32_0 : i32, i32
  }
  func.func @transform_3(%arg0: i32, %arg1: i32) -> (i32, i32) {
    %c0_i32 = arith.constant 0 : i32
    %c0_i32_0 = arith.constant 0 : i32
    %c0_i32_1 = arith.constant 0 : i32
    return %c0_i32, %c0_i32_0 : i32, i32
  }
  func.func @transform_4(%arg0: i32, %arg1: i32) -> (i32, i32, i32) {
    %c0_i32 = arith.constant 0 : i32
    %c0_i32_0 = arith.constant 0 : i32
    %c0_i32_1 = arith.constant 0 : i32
    return %arg1, %c0_i32, %c0_i32_0 : i32, i32, i32
  }
  func.func @transform_5(%arg0: i32, %arg1: i32) -> (i32, i32, i32) {
    %c0_i32 = arith.constant 0 : i32
    %c0_i32_0 = arith.constant 0 : i32
    %c0_i32_1 = arith.constant 0 : i32
    return %arg1, %c0_i32, %c0_i32_0 : i32, i32, i32
  }
  func.func @transform_6(%arg0: i32, %arg1: i32) -> (i32, i32, i32) {
    %c0_i32 = arith.constant 0 : i32
    %c0_i32_0 = arith.constant 0 : i32
    %c0_i32_1 = arith.constant 0 : i32
    return %arg1, %c0_i32, %c0_i32_0 : i32, i32, i32
  }
  func.func @transform_7(%arg0: i32, %arg1: i32) -> (i32, i32, i32) {
    %c0_i32 = arith.constant 0 : i32
    %c0_i32_0 = arith.constant 0 : i32
    %c0_i32_1 = arith.constant 0 : i32
    return %arg1, %c0_i32, %c0_i32_0 : i32, i32, i32
  }
  func.func @transform_8(%arg0: i32, %arg1: i32) -> (i32, i32, i32) {
    %c0_i32 = arith.constant 0 : i32
    %c0_i32_0 = arith.constant 0 : i32
    %c0_i32_1 = arith.constant 0 : i32
    return %arg1, %c0_i32, %c0_i32_0 : i32, i32, i32
  }
  func.func @transform_9(%arg0: i32, %arg1: i32) -> (i32, i32, i32) {
    %c0_i32 = arith.constant 0 : i32
    %c0_i32_0 = arith.constant 0 : i32
    %c0_i32_1 = arith.constant 0 : i32
    return %arg1, %c0_i32, %c0_i32_0 : i32, i32, i32
  }
  func.func @transform_10(%arg0: i32, %arg1: i32) -> (i32, i32) {
    %c0_i32 = arith.constant 0 : i32
    %c0_i32_0 = arith.constant 0 : i32
    %c0_i32_1 = arith.constant 0 : i32
    return %c0_i32, %c0_i32_0 : i32, i32
  }
  func.func @transform_11(%arg0: i32, %arg1: i32) -> (i32, i32, i32) {
    %c0_i32 = arith.constant 0 : i32
    %c0_i32_0 = arith.constant 0 : i32
    %c0_i32_1 = arith.constant 0 : i32
    return %arg0, %c0_i32, %c0_i32_0 : i32, i32, i32
  }
  func.func @transform_12(%arg0: i32, %arg1: i32) -> (i32, i32, i32) {
    %c0_i32 = arith.constant 0 : i32
    %c0_i32_0 = arith.constant 0 : i32
    %c0_i32_1 = arith.constant 0 : i32
    return %arg0, %c0_i32, %c0_i32_0 : i32, i32, i32
  }
}

</mosaic_0001>

<llo_original>
// kernel: model_with_intermediate_layers.1
$region0: #{model_with_intermediate_layers.1}
  #allocation0 [shape = 'u32[]', space=smem, size = 0x4, offset = 0x4, fixed_abs, tag = 'smem constant byte address 0x4 - core index']
  #allocation1 [shape = 'u32[144,128]{1,0:T(1,128)}', space=vmem, size = 0x12000, scoped, tag = 'internal scratch']
  #allocation2 [shape = 'f32[32,128]{1,0:T(8,128)}', space=vmem, size = 0x4000, scoped, tag = 'scratch operand']
  %s0 = inlined_call_operand.vmem [shape: f32[2,32,128], index: 0, kind: input, shape index: {}]
  %s1 = inlined_call_operand.vmem [shape: f32[32,128], index: 1, kind: input, shape index: {}]
  %s2 = inlined_call_operand.hbm [shape: f32[32,32], index: 2, kind: input, shape index: {}]
  %s3 = inlined_call_operand.hbm [shape: bf16[128,128], index: 3, kind: input, shape index: {}]
  %s4 = inlined_call_operand.hbm [shape: bf16[3,128,384], index: 4, kind: input, shape index: {}]
  %s5 = inlined_call_operand.vmem [shape: bf16[3,128,128], index: 5, kind: input, shape index: {}]
  %s6 = inlined_call_operand.vmem [shape: bf16[3,128,512], index: 6, kind: input, shape index: {}]
  %s7 = inlined_call_operand.vmem [shape: bf16[3,512,128], index: 7, kind: input, shape index: {}]
  %s8 = inlined_call_operand.hbm [shape: f32[3,16,128], index: 8, kind: input, shape index: {}]
  %s9 = inlined_call_operand.hbm [shape: f32[3,1,512], index: 9, kind: input, shape index: {}]
  %s10 = inlined_call_operand.hbm [shape: f32[2,128], index: 10, kind: input, shape index: {}]
  %s11 = inlined_call_operand.vmem [shape: f32[2,32,128], index: 11, kind: output, shape index: {0}]
  %s12 = inlined_call_operand.vmem [shape: f32[2,32,128], index: 12, kind: output, shape index: {1}]
  %13 = xla_tuple %s11, %s12
  %s14 = sld [smem:[#allocation0]]
  $region121: #{model_with_intermediate_layers.1} parent=0
    _
  %s16 = ssub.s32 1, %s14
  %s17 = scalar_select 0, %s16, %s14
  $region1: #{model_with_intermediate_layers.1} parent=0
    #allocation3 [shape = 'u8[16384]{0}', space=vmem, size = 0x4000, scoped, tag = 'input window, operand 2, single buffered']
    #allocation4 [shape = 's32[2]{0}', space=sflag, size = 0x8, scoped, tag = 'scoped memory for model_with_intermediate_layers.1']
    #allocation5 [shape = 'u8[32768]{0}', space=vmem, size = 0x8000, scoped, tag = 'input window, operand 3, single buffered']
    #allocation6 [shape = 's32[1]{0}', space=sflag, size = 0x4, scoped, tag = 'scoped memory for model_with_intermediate_layers.1']
    #allocation7 [shape = 'u8[196608]{0}', space=vmem, size = 0x30000, scoped, tag = 'input window, operand 4']
    #allocation8 [shape = 'u8[16384]{0}', space=vmem, size = 0x4000, scoped, tag = 'input window, operand 8']
    #allocation9 [shape = 'u8[4096]{0}', space=vmem, size = 0x1000, scoped, tag = 'input window, operand 9']
    #allocation10 [shape = 'u8[1024]{0}', space=vmem, size = 0x400, scoped, tag = 'input window, operand 10, single buffered']
    %18 = vsyncpa [#allocation4], 0
    %19 = vsyncpa [#allocation6], 0
    loop: start=0, step=1, limit=8
    $region2: #{model_with_intermediate_layers.1} parent=1 // loop_pre_header
      _
    $region3: #{model_with_intermediate_layers.1} parent=1 // loop_header
      %s21 = sphi 0, %s25
      %p22 = scmp.ge.s32.totalorder %s21, 8
      %s28 = sphi 0, %s40
      %s29 = sphi 0, %s36
      %s30 = sphi 0, %s28
      %s31 = sphi 0, %s29
      %s32 = sphi 0, %s30
      %s33 = sphi 0, %s31
      %s43 = sphi 0, %s45
      %s46 = sphi 0, %s43
      %s47 = sphi 0, %s46
      %s63 = sphi 0, %s47
      %s67 = sphi 0, %s67
      %s69 = sphi 0, %s67
      %s70 = sphi 0, %s69
      %s84 = sphi 0, %s70
      %s88 = sphi 0, %s88
      %s90 = sphi 0, %s88
      %s91 = sphi 0, %s90
      %s105 = sphi 0, %s91
      %s109 = sphi 0, %s109
      %s111 = sphi 0, %s109
      %s112 = sphi 0, %s111
      %s126 = sphi 0, %s112
      %s132 = sphi 0, %s134
      %s135 = sphi 0, %s132
      %s136 = sphi 0, %s135
      %s152 = sphi 0, %s136
      %s158 = sphi 0, %s160
      %s161 = sphi 0, %s158
      %s162 = sphi 0, %s161
      %s178 = sphi 0, %s162
      %s184 = sphi 0, %s186
      %s187 = sphi 0, %s184
      %s188 = sphi 0, %s187
      %s204 = sphi 0, %s188
      %s210 = sphi 0, %s212
      %s213 = sphi 0, %s210
      %s214 = sphi 0, %s213
      %s230 = sphi 0, %s214
      %s236 = sphi 0, %s238
      %s239 = sphi 0, %s236
      %s240 = sphi 0, %s239
      %s256 = sphi 0, %s240
      %s262 = sphi 0, %s264
      %s265 = sphi 0, %s262
      %s266 = sphi 0, %s265
      %s282 = sphi 0, %s266
      %s286 = sphi 0, %s286
      %s288 = sphi 0, %s286
      %s289 = sphi 0, %s288
      %s303 = sphi 0, %s289
      %s309 = sphi 0, %s311
      %s312 = sphi 0, %s309
      %s313 = sphi 0, %s312
      %s329 = sphi 0, %s313
      %s335 = sphi 0, %s337
      %s338 = sphi 0, %s335
      %s339 = sphi 0, %s338
      %s355 = sphi 0, %s339
    $region4: #{model_with_intermediate_layers.1} parent=1 // loop_header_branch
      %24 = sbr.rel (%p22) target = $region8
    $region5: #{model_with_intermediate_layers.1} parent=1 // loop_body
      %s26 = ssub.s32 %s21, 1
      %s27 = ssub.s32 %s21, 2
      %s34 = sadd.s32 1, %s29
      %p35 = scmp.ge.s32.totalorder %s34, 3
      %s36 = scalar_select %p35, 0, %s34
      %s37 = sadd.s32 1, %s28
      %s38 = scalar_select %p35, %s37, %s28
      %p39 = scmp.ge.s32.totalorder %s38, 2
      %s40 = scalar_select %p39, 0, %s38
      %s41 = ssub.s32 %s28, %s40
      %p42 = scmp.eq.s32.totalorder %s41, 0
      %s44 = sadd.s32 %s43, 1
      %s45 = scalar_select %p42, %s43, %s44
      %p48 = pneg %p42
      %p49 = scmp.eq.s32.totalorder %s21, 5
      %p50 = por %p48, %p49
      %p51 = scmp.ne.s32.totalorder %s43, %s46
      %p52 = scmp.eq.s32.totalorder %s21, 0
      %p53 = por %p51, %p52
      %p54 = scmp.ne.s32.totalorder %s43, %s46
      %p55 = scmp.eq.s32.totalorder %s26, 5
      %p56 = por %p54, %p55
      %p57 = scmp.ne.s32.totalorder %s46, %s47
      %p58 = scmp.eq.s32.totalorder %s26, 0
      %p59 = por %p57, %p58
      %p60 = scmp.ne.s32.totalorder %s46, %s47
      %p61 = scmp.eq.s32.totalorder %s27, 5
      %p62 = por %p60, %p61
      %p64 = scmp.ne.s32.totalorder %s47, %s63
      %p65 = scmp.eq.s32.totalorder %s27, 0
      %p66 = por %p64, %p65
      %s68 = sadd.s32 %s67, 1
      %p71 = scmp.eq.s32.totalorder %s21, 5
      %p72 = scmp.ne.s32.totalorder %s67, %s69
      %p73 = scmp.eq.s32.totalorder %s21, 0
      %p74 = por %p72, %p73
      %p75 = scmp.ne.s32.totalorder %s67, %s69
      %p76 = scmp.eq.s32.totalorder %s26, 5
      %p77 = por %p75, %p76
      %p78 = scmp.ne.s32.totalorder %s69, %s70
      %p79 = scmp.eq.s32.totalorder %s26, 0
      %p80 = por %p78, %p79
      %p81 = scmp.ne.s32.totalorder %s69, %s70
      %p82 = scmp.eq.s32.totalorder %s27, 5
      %p83 = por %p81, %p82
      %p85 = scmp.ne.s32.totalorder %s70, %s84
      %p86 = scmp.eq.s32.totalorder %s27, 0
      %p87 = por %p85, %p86
      %s89 = sadd.s32 %s88, 1
      %p92 = scmp.eq.s32.totalorder %s21, 5
      %p93 = scmp.ne.s32.totalorder %s88, %s90
      %p94 = scmp.eq.s32.totalorder %s21, 0
      %p95 = por %p93, %p94
      %p96 = scmp.ne.s32.totalorder %s88, %s90
      %p97 = scmp.eq.s32.totalorder %s26, 5
      %p98 = por %p96, %p97
      %p99 = scmp.ne.s32.totalorder %s90, %s91
      %p100 = scmp.eq.s32.totalorder %s26, 0
      %p101 = por %p99, %p100
      %p102 = scmp.ne.s32.totalorder %s90, %s91
      %p103 = scmp.eq.s32.totalorder %s27, 5
      %p104 = por %p102, %p103
      %p106 = scmp.ne.s32.totalorder %s91, %s105
      %p107 = scmp.eq.s32.totalorder %s27, 0
      %p108 = por %p106, %p107
      %s110 = sadd.s32 %s109, 1
      %p113 = scmp.eq.s32.totalorder %s21, 5
      %p114 = scmp.ne.s32.totalorder %s109, %s111
      %p115 = scmp.eq.s32.totalorder %s21, 0
      %p116 = por %p114, %p115
      %p117 = scmp.ne.s32.totalorder %s109, %s111
      %p118 = scmp.eq.s32.totalorder %s26, 5
      %p119 = por %p117, %p118
      %p120 = scmp.ne.s32.totalorder %s111, %s112
      %p121 = scmp.eq.s32.totalorder %s26, 0
      %p122 = por %p120, %p121
      %p123 = scmp.ne.s32.totalorder %s111, %s112
      %p124 = scmp.eq.s32.totalorder %s27, 5
      %p125 = por %p123, %p124
      %p127 = scmp.ne.s32.totalorder %s112, %s126
      %p128 = scmp.eq.s32.totalorder %s27, 0
      %p129 = por %p127, %p128
      %s130 = ssub.s32 %s29, %s36
      %p131 = scmp.eq.s32.totalorder %s130, 0
      %s133 = sadd.s32 %s132, 1
      %s134 = scalar_select %p131, %s132, %s133
      %p137 = pneg %p131
      %p138 = scmp.eq.s32.totalorder %s21, 5
      %p139 = por %p137, %p138
      %p140 = scmp.ne.s32.totalorder %s132, %s135
      %p141 = scmp.eq.s32.totalorder %s21, 0
      %p142 = por %p140, %p141
      %p143 = scmp.ne.s32.totalorder %s132, %s135
      %p144 = scmp.eq.s32.totalorder %s26, 5
      %p145 = por %p143, %p144
      %p146 = scmp.ne.s32.totalorder %s135, %s136
      %p147 = scmp.eq.s32.totalorder %s26, 0
      %p148 = por %p146, %p147
      %p149 = scmp.ne.s32.totalorder %s135, %s136
      %p150 = scmp.eq.s32.totalorder %s27, 5
      %p151 = por %p149, %p150
      %p153 = scmp.ne.s32.totalorder %s136, %s152
      %p154 = scmp.eq.s32.totalorder %s27, 0
      %p155 = por %p153, %p154
      %s156 = ssub.s32 %s29, %s36
      %p157 = scmp.eq.s32.totalorder %s156, 0
      %s159 = sadd.s32 %s158, 1
      %s160 = scalar_select %p157, %s158, %s159
      %p163 = pneg %p157
      %p164 = scmp.eq.s32.totalorder %s21, 5
      %p165 = por %p163, %p164
      %p166 = scmp.ne.s32.totalorder %s158, %s161
      %p167 = scmp.eq.s32.totalorder %s21, 0
      %p168 = por %p166, %p167
      %p169 = scmp.ne.s32.totalorder %s158, %s161
      %p170 = scmp.eq.s32.totalorder %s26, 5
      %p171 = por %p169, %p170
      %p172 = scmp.ne.s32.totalorder %s161, %s162
      %p173 = scmp.eq.s32.totalorder %s26, 0
      %p174 = por %p172, %p173
      %p175 = scmp.ne.s32.totalorder %s161, %s162
      %p176 = scmp.eq.s32.totalorder %s27, 5
      %p177 = por %p175, %p176
      %p179 = scmp.ne.s32.totalorder %s162, %s178
      %p180 = scmp.eq.s32.totalorder %s27, 0
      %p181 = por %p179, %p180
      %s182 = ssub.s32 %s29, %s36
      %p183 = scmp.eq.s32.totalorder %s182, 0
      %s185 = sadd.s32 %s184, 1
      %s186 = scalar_select %p183, %s184, %s185
      %p189 = pneg %p183
      %p190 = scmp.eq.s32.totalorder %s21, 5
      %p191 = por %p189, %p190
      %p192 = scmp.ne.s32.totalorder %s184, %s187
      %p193 = scmp.eq.s32.totalorder %s21, 0
      %p194 = por %p192, %p193
      %p195 = scmp.ne.s32.totalorder %s184, %s187
      %p196 = scmp.eq.s32.totalorder %s26, 5
      %p197 = por %p195, %p196
      %p198 = scmp.ne.s32.totalorder %s187, %s188
      %p199 = scmp.eq.s32.totalorder %s26, 0
      %p200 = por %p198, %p199
      %p201 = scmp.ne.s32.totalorder %s187, %s188
      %p202 = scmp.eq.s32.totalorder %s27, 5
      %p203 = por %p201, %p202
      %p205 = scmp.ne.s32.totalorder %s188, %s204
      %p206 = scmp.eq.s32.totalorder %s27, 0
      %p207 = por %p205, %p206
      %s208 = ssub.s32 %s29, %s36
      %p209 = scmp.eq.s32.totalorder %s208, 0
      %s211 = sadd.s32 %s210, 1
      %s212 = scalar_select %p209, %s210, %s211
      %p215 = pneg %p209
      %p216 = scmp.eq.s32.totalorder %s21, 5
      %p217 = por %p215, %p216
      %p218 = scmp.ne.s32.totalorder %s210, %s213
      %p219 = scmp.eq.s32.totalorder %s21, 0
      %p220 = por %p218, %p219
      %p221 = scmp.ne.s32.totalorder %s210, %s213
      %p222 = scmp.eq.s32.totalorder %s26, 5
      %p223 = por %p221, %p222
      %p224 = scmp.ne.s32.totalorder %s213, %s214
      %p225 = scmp.eq.s32.totalorder %s26, 0
      %p226 = por %p224, %p225
      %p227 = scmp.ne.s32.totalorder %s213, %s214
      %p228 = scmp.eq.s32.totalorder %s27, 5
      %p229 = por %p227, %p228
      %p231 = scmp.ne.s32.totalorder %s214, %s230
      %p232 = scmp.eq.s32.totalorder %s27, 0
      %p233 = por %p231, %p232
      %s234 = ssub.s32 %s29, %s36
      %p235 = scmp.eq.s32.totalorder %s234, 0
      %s237 = sadd.s32 %s236, 1
      %s238 = scalar_select %p235, %s236, %s237
      %p241 = pneg %p235
      %p242 = scmp.eq.s32.totalorder %s21, 5
      %p243 = por %p241, %p242
      %p244 = scmp.ne.s32.totalorder %s236, %s239
      %p245 = scmp.eq.s32.totalorder %s21, 0
      %p246 = por %p244, %p245
      %p247 = scmp.ne.s32.totalorder %s236, %s239
      %p248 = scmp.eq.s32.totalorder %s26, 5
      %p249 = por %p247, %p248
      %p250 = scmp.ne.s32.totalorder %s239, %s240
      %p251 = scmp.eq.s32.totalorder %s26, 0
      %p252 = por %p250, %p251
      %p253 = scmp.ne.s32.totalorder %s239, %s240
      %p254 = scmp.eq.s32.totalorder %s27, 5
      %p255 = por %p253, %p254
      %p257 = scmp.ne.s32.totalorder %s240, %s256
      %p258 = scmp.eq.s32.totalorder %s27, 0
      %p259 = por %p257, %p258
      %s260 = ssub.s32 %s29, %s36
      %p261 = scmp.eq.s32.totalorder %s260, 0
      %s263 = sadd.s32 %s262, 1
      %s264 = scalar_select %p261, %s262, %s263
      %p267 = pneg %p261
      %p268 = scmp.eq.s32.totalorder %s21, 5
      %p269 = por %p267, %p268
      %p270 = scmp.ne.s32.totalorder %s262, %s265
      %p271 = scmp.eq.s32.totalorder %s21, 0
      %p272 = por %p270, %p271
      %p273 = scmp.ne.s32.totalorder %s262, %s265
      %p274 = scmp.eq.s32.totalorder %s26, 5
      %p275 = por %p273, %p274
      %p276 = scmp.ne.s32.totalorder %s265, %s266
      %p277 = scmp.eq.s32.totalorder %s26, 0
      %p278 = por %p276, %p277
      %p279 = scmp.ne.s32.totalorder %s265, %s266
      %p280 = scmp.eq.s32.totalorder %s27, 5
      %p281 = por %p279, %p280
      %p283 = scmp.ne.s32.totalorder %s266, %s282
      %p284 = scmp.eq.s32.totalorder %s27, 0
      %p285 = por %p283, %p284
      %s287 = sadd.s32 %s286, 1
      %p290 = scmp.eq.s32.totalorder %s21, 5
      %p291 = scmp.ne.s32.totalorder %s286, %s288
      %p292 = scmp.eq.s32.totalorder %s21, 0
      %p293 = por %p291, %p292
      %p294 = scmp.ne.s32.totalorder %s286, %s288
      %p295 = scmp.eq.s32.totalorder %s26, 5
      %p296 = por %p294, %p295
      %p297 = scmp.ne.s32.totalorder %s288, %s289
      %p298 = scmp.eq.s32.totalorder %s26, 0
      %p299 = por %p297, %p298
      %p300 = scmp.ne.s32.totalorder %s288, %s289
      %p301 = scmp.eq.s32.totalorder %s27, 5
      %p302 = por %p300, %p301
      %p304 = scmp.ne.s32.totalorder %s289, %s303
      %p305 = scmp.eq.s32.totalorder %s27, 0
      %p306 = por %p304, %p305
      %s307 = ssub.s32 %s28, %s40
      %p308 = scmp.eq.s32.totalorder %s307, 0
      %s310 = sadd.s32 %s309, 1
      %s311 = scalar_select %p308, %s309, %s310
      %p314 = pneg %p308
      %p315 = scmp.eq.s32.totalorder %s21, 5
      %p316 = por %p314, %p315
      %p317 = scmp.ne.s32.totalorder %s309, %s312
      %p318 = scmp.eq.s32.totalorder %s21, 0
      %p319 = por %p317, %p318
      %p320 = scmp.ne.s32.totalorder %s309, %s312
      %p321 = scmp.eq.s32.totalorder %s26, 5
      %p322 = por %p320, %p321
      %p323 = scmp.ne.s32.totalorder %s312, %s313
      %p324 = scmp.eq.s32.totalorder %s26, 0
      %p325 = por %p323, %p324
      %p326 = scmp.ne.s32.totalorder %s312, %s313
      %p327 = scmp.eq.s32.totalorder %s27, 5
      %p328 = por %p326, %p327
      %p330 = scmp.ne.s32.totalorder %s313, %s329
      %p331 = scmp.eq.s32.totalorder %s27, 0
      %p332 = por %p330, %p331
      %s333 = ssub.s32 %s28, %s40
      %p334 = scmp.eq.s32.totalorder %s333, 0
      %s336 = sadd.s32 %s335, 1
      %s337 = scalar_select %p334, %s335, %s336
      %p340 = pneg %p334
      %p341 = scmp.eq.s32.totalorder %s21, 5
      %p342 = por %p340, %p341
      %p343 = scmp.ne.s32.totalorder %s335, %s338
      %p344 = scmp.eq.s32.totalorder %s21, 0
      %p345 = por %p343, %p344
      %p346 = scmp.ne.s32.totalorder %s335, %s338
      %p347 = scmp.eq.s32.totalorder %s26, 5
      %p348 = por %p346, %p347
      %p349 = scmp.ne.s32.totalorder %s338, %s339
      %p350 = scmp.eq.s32.totalorder %s26, 0
      %p351 = por %p349, %p350
      %p352 = scmp.ne.s32.totalorder %s338, %s339
      %p353 = scmp.eq.s32.totalorder %s27, 5
      %p354 = por %p352, %p353
      %p356 = scmp.ne.s32.totalorder %s339, %s355
      %p357 = scmp.eq.s32.totalorder %s27, 0
      %p358 = por %p356, %p357
      %p359 = scmp.le.s32.totalorder 1, %s21
      %p360 = scmp.lt.s32.totalorder %s21, 7
      %p361 = pnand %p359, %p360
      %p362 = pneg %p361
      // Predicated region
      $region9: #{model_with_intermediate_layers.1} parent=5 // pred_check
        _
      $region10: #{model_with_intermediate_layers.1} parent=5 // pred_check_branch
        %364 = sbr.rel (%p361) target = $region12
      $region11: #{model_with_intermediate_layers.1} parent=5 // pred_region
        %s365 = ssub.s32 %s21, 1
        // Predicated region
        $region13: #{model_with_intermediate_layers.1} parent=11 // pred_check
          %p366 = pneg %p80
        $region14: #{model_with_intermediate_layers.1} parent=11 // pred_check_branch
          %368 = sbr.rel (%p366) target = $region16
        $region15: #{model_with_intermediate_layers.1} parent=11 // pred_region
          _
        $region16: #{model_with_intermediate_layers.1} parent=11 // pred_fallthru
          _
        // Predicated region
        $region17: #{model_with_intermediate_layers.1} parent=11 // pred_check
          %p369 = pneg %p101
        $region18: #{model_with_intermediate_layers.1} parent=11 // pred_check_branch
          %371 = sbr.rel (%p369) target = $region20
        $region19: #{model_with_intermediate_layers.1} parent=11 // pred_region
          %s373 = ssub.s32 512, 512
          %374 = vsyncadd [#allocation4], %s373
          %s375 = sshll.u32 [#allocation3], 4
          %s376 = int_to_ptr.vmem [resolvable:$true] %s375
          %381 = dma.hbm_to_vmem [thread:$0]  %s2, 512, %s376, [#allocation4], 128, 128, 8
        $region20: #{model_with_intermediate_layers.1} parent=11 // pred_fallthru
          _
        // Predicated region
        $region21: #{model_with_intermediate_layers.1} parent=11 // pred_check
          %p382 = pneg %p122
        $region22: #{model_with_intermediate_layers.1} parent=11 // pred_check_branch
          %384 = sbr.rel (%p382) target = $region24
        $region23: #{model_with_intermediate_layers.1} parent=11 // pred_region
          %s386 = ssub.s32 1024, 1024
          %387 = vsyncadd [#allocation6], %s386
          %s388 = sshll.u32 [#allocation5], 4
          %s389 = int_to_ptr.vmem [resolvable:$true] %s388
          %394 = dma.hbm_to_vmem [thread:$0]  %s3, 1024, %s389, [#allocation6], 64, 64, 4
        $region24: #{model_with_intermediate_layers.1} parent=11 // pred_fallthru
          _
        // Predicated region
        $region25: #{model_with_intermediate_layers.1} parent=11 // pred_check
          %p395 = pneg %p299
        $region26: #{model_with_intermediate_layers.1} parent=11 // pred_check_branch
          %397 = sbr.rel (%p395) target = $region28
        $region27: #{model_with_intermediate_layers.1} parent=11 // pred_region
          %s399 = ssub.s32 32, 32
          %400 = vsyncadd [#allocation6], %s399
          %s402 = sshll.u32 [#allocation10], 4
          %s403 = int_to_ptr.vmem [resolvable:$true] %s402
          %405 = dma.hbm_to_vmem [thread:$0]  %s10, 32, %s403, [#allocation6]
        $region28: #{model_with_intermediate_layers.1} parent=11 // pred_fallthru
          _
      $region12: #{model_with_intermediate_layers.1} parent=5 // pred_fallthru
        _
      %p406 = scmp.lt.s32.totalorder %s21, 6
      // Predicated region
      $region29: #{model_with_intermediate_layers.1} parent=5 // pred_check
        %p407 = pneg %p406
      $region30: #{model_with_intermediate_layers.1} parent=5 // pred_check_branch
        %409 = sbr.rel (%p407) target = $region32
      $region31: #{model_with_intermediate_layers.1} parent=5 // pred_region
        // Predicated region
        $region33: #{model_with_intermediate_layers.1} parent=31 // pred_check
          %p410 = pneg %p53
        $region34: #{model_with_intermediate_layers.1} parent=31 // pred_check_branch
          %412 = sbr.rel (%p410) target = $region36
        $region35: #{model_with_intermediate_layers.1} parent=31 // pred_region
          %p413 = scmp.lt.s32.totalorder %s28, 1
          %s414 = scalar_select %p413, %s28, 1
          %s415 = smul.addr %s414, 4
          %s416 = smul.addr %s415, 8
          %s417 = scalar_lea.vmem %s0, %s416
        $region36: #{model_with_intermediate_layers.1} parent=31 // pred_fallthru
          _
        // Predicated region
        $region37: #{model_with_intermediate_layers.1} parent=31 // pred_check
          %p418 = pneg %p142
        $region38: #{model_with_intermediate_layers.1} parent=31 // pred_check_branch
          %420 = sbr.rel (%p418) target = $region40
        $region39: #{model_with_intermediate_layers.1} parent=31 // pred_region
          %s421 = sand.u32 %s21, 1
          %s422 = scalar_lea.sflag [#allocation4], %s421
          %s423 = sand.u32 %s132, 1
          %s424 = smul.addr %s423, 192
          %s425 = scalar_lea.vmem [#allocation7], %s424
          %s427 = ssub.s32 3072, 3072
          %428 = vsyncadd %s422, %s427
          %s429 = smul.addr %s29, 48
          %s430 = smul.addr %s429, 64
          %s431 = scalar_lea.hbm %s4, %s430
          %s432 = sshll.u32 %s425, 4
          %s433 = int_to_ptr.vmem [resolvable:$true] %s432
          %438 = dma.hbm_to_vmem [thread:$0]  %s431, 3072, %s433, %s422, 192, 192, 12
        $region40: #{model_with_intermediate_layers.1} parent=31 // pred_fallthru
          _
        // Predicated region
        $region41: #{model_with_intermediate_layers.1} parent=31 // pred_check
          %p439 = pneg %p168
        $region42: #{model_with_intermediate_layers.1} parent=31 // pred_check_branch
          %441 = sbr.rel (%p439) target = $region44
        $region43: #{model_with_intermediate_layers.1} parent=31 // pred_region
          %p442 = scmp.lt.s32.totalorder %s29, 2
          %s443 = scalar_select %p442, %s29, 2
          %s444 = smul.addr %s443, 16
          %s445 = smul.addr %s444, 4
          %s446 = scalar_lea.vmem %s5, %s445
        $region44: #{model_with_intermediate_layers.1} parent=31 // pred_fallthru
          _
        // Predicated region
        $region45: #{model_with_intermediate_layers.1} parent=31 // pred_check
          %p447 = pneg %p194
        $region46: #{model_with_intermediate_layers.1} parent=31 // pred_check_branch
          %449 = sbr.rel (%p447) target = $region48
        $region47: #{model_with_intermediate_layers.1} parent=31 // pred_region
          %p450 = scmp.lt.s32.totalorder %s29, 2
          %s451 = scalar_select %p450, %s29, 2
          %s452 = smul.addr %s451, 64
          %s453 = smul.addr %s452, 4
          %s454 = scalar_lea.vmem %s6, %s453
        $region48: #{model_with_intermediate_layers.1} parent=31 // pred_fallthru
          _
        // Predicated region
        $region49: #{model_with_intermediate_layers.1} parent=31 // pred_check
          %p455 = pneg %p220
        $region50: #{model_with_intermediate_layers.1} parent=31 // pred_check_branch
          %457 = sbr.rel (%p455) target = $region52
        $region51: #{model_with_intermediate_layers.1} parent=31 // pred_region
          %p458 = scmp.lt.s32.totalorder %s29, 2
          %s459 = scalar_select %p458, %s29, 2
          %s460 = smul.addr %s459, 64
          %s461 = smul.addr %s460, 4
          %s462 = scalar_lea.vmem %s7, %s461
        $region52: #{model_with_intermediate_layers.1} parent=31 // pred_fallthru
          _
        // Predicated region
        $region53: #{model_with_intermediate_layers.1} parent=31 // pred_check
          %p463 = pneg %p246
        $region54: #{model_with_intermediate_layers.1} parent=31 // pred_check_branch
          %465 = sbr.rel (%p463) target = $region56
        $region55: #{model_with_intermediate_layers.1} parent=31 // pred_region
          %s466 = sand.u32 %s21, 1
          %s467 = scalar_lea.sflag [#allocation4], %s466
          %s468 = sand.u32 %s236, 1
          %s469 = smul.addr %s468, 16
          %s470 = scalar_lea.vmem [#allocation8], %s469
          %s472 = ssub.s32 256, 256
          %473 = vsyncadd %s467, %s472
          %s474 = smul.addr %s29, 2
          %s475 = smul.addr %s474, 128
          %s476 = scalar_lea.hbm %s8, %s475
          %s477 = sshll.u32 %s470, 4
          %s478 = int_to_ptr.vmem [resolvable:$true] %s477
          %483 = dma.hbm_to_vmem [thread:$0]  %s476, 256, %s478, %s467, 128, 128, 8
        $region56: #{model_with_intermediate_layers.1} parent=31 // pred_fallthru
          _
        // Predicated region
        $region57: #{model_with_intermediate_layers.1} parent=31 // pred_check
          %p484 = pneg %p272
        $region58: #{model_with_intermediate_layers.1} parent=31 // pred_check_branch
          %486 = sbr.rel (%p484) target = $region60
        $region59: #{model_with_intermediate_layers.1} parent=31 // pred_region
          %s487 = sand.u32 %s21, 1
          %s488 = scalar_lea.sflag [#allocation4], %s487
          %s489 = sand.u32 %s262, 1
          %s490 = smul.addr %s489, 4
          %s491 = scalar_lea.vmem [#allocation9], %s490
          %s493 = ssub.s32 64, 64
          %494 = vsyncadd %s488, %s493
          %s495 = smul.addr %s29, 4
          %s496 = smul.addr %s495, 16
          %s497 = scalar_lea.hbm %s9, %s496
          %s499 = sshll.u32 %s491, 4
          %s500 = int_to_ptr.vmem [resolvable:$true] %s499
          %502 = dma.hbm_to_vmem [thread:$0]  %s497, 64, %s500, %s488
        $region60: #{model_with_intermediate_layers.1} parent=31 // pred_fallthru
          _
      $region32: #{model_with_intermediate_layers.1} parent=5 // pred_fallthru
        _
      %p503 = scmp.le.s32.totalorder 1, %s21
      %p504 = scmp.lt.s32.totalorder %s21, 7
      %p505 = pnand %p503, %p504
      %p506 = pneg %p505
      // Predicated region
      $region61: #{model_with_intermediate_layers.1} parent=5 // pred_check
        _
      $region62: #{model_with_intermediate_layers.1} parent=5 // pred_check_branch
        %508 = sbr.rel (%p505) target = $region64
      $region63: #{model_with_intermediate_layers.1} parent=5 // pred_region
        %s509 = ssub.s32 %s21, 1
        // Predicated region
        $region65: #{model_with_intermediate_layers.1} parent=63 // pred_check
          %p510 = pneg %p101
        $region66: #{model_with_intermediate_layers.1} parent=63 // pred_check_branch
          %512 = sbr.rel (%p510) target = $region68
        $region67: #{model_with_intermediate_layers.1} parent=63 // pred_region
          %513 = dma.done [#allocation4], 512
        $region68: #{model_with_intermediate_layers.1} parent=63 // pred_fallthru
          _
        // Predicated region
        $region69: #{model_with_intermediate_layers.1} parent=63 // pred_check
          %p514 = pneg %p122
        $region70: #{model_with_intermediate_layers.1} parent=63 // pred_check_branch
          %516 = sbr.rel (%p514) target = $region72
        $region71: #{model_with_intermediate_layers.1} parent=63 // pred_region
          %517 = dma.done [#allocation6], 1024
        $region72: #{model_with_intermediate_layers.1} parent=63 // pred_fallthru
          _
        %s518 = sand.u32 %s26, 1
        %s519 = scalar_lea.sflag [#allocation4], %s518
        %s520 = sand.u32 %s135, 1
        %s521 = smul.addr %s520, 192
        %s522 = scalar_lea.vmem [#allocation7], %s521
        // Predicated region
        $region73: #{model_with_intermediate_layers.1} parent=63 // pred_check
          %p523 = pneg %p148
        $region74: #{model_with_intermediate_layers.1} parent=63 // pred_check_branch
          %525 = sbr.rel (%p523) target = $region76
        $region75: #{model_with_intermediate_layers.1} parent=63 // pred_region
          %526 = dma.done %s519, 3072
        $region76: #{model_with_intermediate_layers.1} parent=63 // pred_fallthru
          _
        %s527 = sand.u32 %s26, 1
        %s528 = scalar_lea.sflag [#allocation4], %s527
        %s529 = sand.u32 %s239, 1
        %s530 = smul.addr %s529, 16
        %s531 = scalar_lea.vmem [#allocation8], %s530
        // Predicated region
        $region77: #{model_with_intermediate_layers.1} parent=63 // pred_check
          %p532 = pneg %p252
        $region78: #{model_with_intermediate_layers.1} parent=63 // pred_check_branch
          %534 = sbr.rel (%p532) target = $region80
        $region79: #{model_with_intermediate_layers.1} parent=63 // pred_region
          %535 = dma.done %s528, 256
        $region80: #{model_with_intermediate_layers.1} parent=63 // pred_fallthru
          _
        %s536 = sand.u32 %s26, 1
        %s537 = scalar_lea.sflag [#allocation4], %s536
        %s538 = sand.u32 %s265, 1
        %s539 = smul.addr %s538, 4
        %s540 = scalar_lea.vmem [#allocation9], %s539
        // Predicated region
        $region81: #{model_with_intermediate_layers.1} parent=63 // pred_check
          %p541 = pneg %p278
        $region82: #{model_with_intermediate_layers.1} parent=63 // pred_check_branch
          %543 = sbr.rel (%p541) target = $region84
        $region83: #{model_with_intermediate_layers.1} parent=63 // pred_region
          %544 = dma.done %s537, 64
        $region84: #{model_with_intermediate_layers.1} parent=63 // pred_fallthru
          _
        // Predicated region
        $region85: #{model_with_intermediate_layers.1} parent=63 // pred_check
          %p545 = pneg %p299
        $region86: #{model_with_intermediate_layers.1} parent=63 // pred_check_branch
          %547 = sbr.rel (%p545) target = $region88
        $region87: #{model_with_intermediate_layers.1} parent=63 // pred_region
          %548 = dma.done [#allocation6], 32
        $region88: #{model_with_intermediate_layers.1} parent=63 // pred_fallthru
          _
        %p549 = scmp.lt.s32.totalorder %s30, 1
        %s550 = scalar_select %p549, %s30, 1
        %s551 = smul.addr %s550, 4
        %s552 = smul.addr %s551, 8
        %s553 = scalar_lea.vmem %s0, %s552
        %p554 = pneg %p59
        %p555 = pneg %p56
        %p556 = pneg %p80
        %p557 = pneg %p77
        %p558 = pneg %p101
        %p559 = pneg %p98
        %p560 = pneg %p122
        %p561 = pneg %p119
        %s562 = sand.u32 %s26, 1
        %s563 = scalar_lea.sflag [#allocation4], %s562
        %s564 = sand.u32 %s135, 1
        %s565 = smul.addr %s564, 192
        %s566 = scalar_lea.vmem [#allocation7], %s565
        %p567 = pneg %p148
        %p568 = pneg %p145
        %p569 = scmp.lt.s32.totalorder %s31, 2
        %s570 = scalar_select %p569, %s31, 2
        %s571 = smul.addr %s570, 16
        %s572 = smul.addr %s571, 4
        %s573 = scalar_lea.vmem %s5, %s572
        %p574 = pneg %p174
        %p575 = pneg %p171
        %p576 = scmp.lt.s32.totalorder %s31, 2
        %s577 = scalar_select %p576, %s31, 2
        %s578 = smul.addr %s577, 64
        %s579 = smul.addr %s578, 4
        %s580 = scalar_lea.vmem %s6, %s579
        %p581 = pneg %p200
        %p582 = pneg %p197
        %p583 = scmp.lt.s32.totalorder %s31, 2
        %s584 = scalar_select %p583, %s31, 2
        %s585 = smul.addr %s584, 64
        %s586 = smul.addr %s585, 4
        %s587 = scalar_lea.vmem %s7, %s586
        %p588 = pneg %p226
        %p589 = pneg %p223
        %s590 = sand.u32 %s26, 1
        %s591 = scalar_lea.sflag [#allocation4], %s590
        %s592 = sand.u32 %s239, 1
        %s593 = smul.addr %s592, 16
        %s594 = scalar_lea.vmem [#allocation8], %s593
        %p595 = pneg %p252
        %p596 = pneg %p249
        %s597 = sand.u32 %s26, 1
        %s598 = scalar_lea.sflag [#allocation4], %s597
        %s599 = sand.u32 %s265, 1
        %s600 = smul.addr %s599, 4
        %s601 = scalar_lea.vmem [#allocation9], %s600
        %p602 = pneg %p278
        %p603 = pneg %p275
        %p604 = pneg %p299
        %p605 = pneg %p296
        %p606 = pneg %p325
        %p607 = pneg %p322
        %p608 = scmp.lt.s32.totalorder %s30, 1
        %s609 = scalar_select %p608, %s30, 1
        %s610 = smul.addr %s609, 4
        %s611 = smul.addr %s610, 8
        %s612 = scalar_lea.vmem %s11, %s611
        %p613 = pneg %p351
        %p614 = pneg %p348
        %p615 = scmp.lt.s32.totalorder %s30, 1
        %s616 = scalar_select %p615, %s30, 1
        %s617 = smul.addr %s616, 4
        %s618 = smul.addr %s617, 8
        %s619 = scalar_lea.vmem %s12, %s618
        %p620 = scmp.lt.s32.totalorder %s30, 1
        %s621 = scalar_select %p620, %s30, 1
        %s622 = smul.addr %s621, 4
        %s623 = smul.addr %s622, 8
        %s624 = scalar_lea.vmem %s0, %s623
        %p625 = scmp.lt.s32.totalorder %s31, 2
        %s626 = scalar_select %p625, %s31, 2
        %s627 = smul.addr %s626, 16
        %s628 = smul.addr %s627, 4
        %s629 = scalar_lea.vmem %s5, %s628
        %p630 = scmp.lt.s32.totalorder %s31, 2
        %s631 = scalar_select %p630, %s31, 2
        %s632 = smul.addr %s631, 64
        %s633 = smul.addr %s632, 4
        %s634 = scalar_lea.vmem %s6, %s633
        %p635 = scmp.lt.s32.totalorder %s31, 2
        %s636 = scalar_select %p635, %s31, 2
        %s637 = smul.addr %s636, 64
        %s638 = smul.addr %s637, 4
        %s639 = scalar_lea.vmem %s7, %s638
        %p640 = scmp.lt.s32.totalorder %s30, 1
        %s641 = scalar_select %p640, %s30, 1
        %s642 = smul.addr %s641, 4
        %s643 = smul.addr %s642, 8
        %s644 = scalar_lea.vmem %s11, %s643
        %p645 = scmp.lt.s32.totalorder %s30, 1
        %s646 = scalar_select %p645, %s30, 1
        %s647 = smul.addr %s646, 4
        %s648 = smul.addr %s647, 8
        %s649 = scalar_lea.vmem %s12, %s648
        %p651 = scmp.eq.s32.totalorder %s31, 0
        // Predicated region
        $region89: #{model_with_intermediate_layers.1} parent=63 // pred_check
          %p652 = pneg %p651
        $region90: #{model_with_intermediate_layers.1} parent=63 // pred_check_branch
          %654 = sbr.rel (%p652) target = $region92
        $region91: #{model_with_intermediate_layers.1} parent=63 // pred_region
          %v655 = vld [vmem:[%s624] sm:$0xff]
          %v656 = vld [vmem:[%s624 + $0x8] sm:$0xff]
          %v657 = vld [vmem:[%s624 + $0x10] sm:$0xff]
          %v658 = vld [vmem:[%s624 + $0x18] sm:$0xff]
          %v659 = vpack.c.bf16 %v656, %v655
          %v660 = vpack.c.bf16 %v658, %v657
          %v661 = vld [vmem:[#allocation5] sm:$0xf]
          %v662 = vld [vmem:[#allocation5 + $0x4] sm:$0xf]
          %v663 = vld [vmem:[#allocation5 + $0x8] sm:$0xf]
          %v664 = vld [vmem:[#allocation5 + $0xc] sm:$0xf]
          %v665 = vld [vmem:[#allocation5 + $0x10] sm:$0xf]
          %v666 = vld [vmem:[#allocation5 + $0x14] sm:$0xf]
          %v667 = vld [vmem:[#allocation5 + $0x18] sm:$0xf]
          %v668 = vld [vmem:[#allocation5 + $0x1c] sm:$0xf]
          %v669 = vld [vmem:[#allocation5 + $0x20] sm:$0xf]
          %v670 = vld [vmem:[#allocation5 + $0x24] sm:$0xf]
          %v671 = vld [vmem:[#allocation5 + $0x28] sm:$0xf]
          %v672 = vld [vmem:[#allocation5 + $0x2c] sm:$0xf]
          %v673 = vld [vmem:[#allocation5 + $0x30] sm:$0xf]
          %v674 = vld [vmem:[#allocation5 + $0x34] sm:$0xf]
          %v675 = vld [vmem:[#allocation5 + $0x38] sm:$0xf]
          %v676 = vld [vmem:[#allocation5 + $0x3c] sm:$0xf]
          %v677 = vld [vmem:[%s1] sm:$0xff]
          %v678 = vld [vmem:[%s1 + $0x8] sm:$0xff]
          %v679 = vld [vmem:[%s1 + $0x10] sm:$0xff]
          %v680 = vld [vmem:[%s1 + $0x18] sm:$0xff]
          %v697 = vunpack.c.l.b16 %v661
          %v698 = vunpack.c.l.b16 %v662
          %v699 = vunpack.c.l.b16 %v663
          %v700 = vunpack.c.l.b16 %v664
          %v701 = vunpack.c.l.b16 %v665
          %v702 = vunpack.c.l.b16 %v666
          %v703 = vunpack.c.l.b16 %v667
          %v704 = vunpack.c.l.b16 %v668
          %v705 = vunpack.c.l.b16 %v669
          %v706 = vunpack.c.l.b16 %v670
          %v707 = vunpack.c.l.b16 %v671
          %v708 = vunpack.c.l.b16 %v672
          %v709 = vunpack.c.l.b16 %v673
          %v710 = vunpack.c.l.b16 %v674
          %v711 = vunpack.c.l.b16 %v675
          %v712 = vunpack.c.l.b16 %v676
          %v713 = vpack.c.b16 %v698, %v697
          %v714 = vpack.c.b16 %v700, %v699
          %v715 = vpack.c.b16 %v702, %v701
          %v716 = vpack.c.b16 %v704, %v703
          %v717 = vpack.c.b16 %v706, %v705
          %v718 = vpack.c.b16 %v708, %v707
          %v719 = vpack.c.b16 %v710, %v709
          %v720 = vpack.c.b16 %v712, %v711
          %729 = vmatprep.subr.bf16.mxu0 0
          %730 = vmatpush1.bf16.msra.mxu0 %v720
          %731 = vmatprep.subr.bf16.mxu0 0
          %732 = vmatpush1.bf16.msra.mxu0 %v719
          %733 = vmatprep.subr.bf16.mxu0 0
          %734 = vmatpush1.bf16.msra.mxu0 %v718
          %735 = vmatprep.subr.bf16.mxu0 0
          %736 = vmatpush1.bf16.msra.mxu0 %v717
          %737 = vmatprep.subr.bf16.mxu0 0
          %738 = vmatpush1.bf16.msra.mxu0 %v716
          %739 = vmatprep.subr.bf16.mxu0 0
          %740 = vmatpush1.bf16.msra.mxu0 %v715
          %741 = vmatprep.subr.bf16.mxu0 0
          %742 = vmatpush1.bf16.msra.mxu0 %v714
          %743 = vmatprep.subr.bf16.mxu0 0
          %744 = vmatpush1.bf16.msra.mxu0 %v713
          %745 = vmatprep.subr.bf16.mxu0 0
          %746 = vmatpush2.bf16.msra.mxu0 0
          %747 = vmatprep.subr.bf16.mxu0 0
          %748 = vmatpush2.bf16.msra.mxu0 0
          %749 = vmatprep.subr.bf16.mxu0 0
          %750 = vmatpush2.bf16.msra.mxu0 0
          %751 = vmatprep.subr.bf16.mxu0 0
          %752 = vmatpush2.bf16.msra.mxu0 0
          %753 = vmatprep.subr.bf16.mxu0 0
          %754 = vmatpush2.bf16.msra.mxu0 0
          %755 = vmatprep.subr.bf16.mxu0 0
          %756 = vmatpush2.bf16.msra.mxu0 0
          %757 = vmatprep.subr.bf16.mxu0 0
          %758 = vmatpush2.bf16.msra.mxu0 0
          %759 = vmatprep.subr.bf16.mxu0 0
          %760 = vmatpush2.bf16.msra.mxu0 0
          %761 = vmatprep.mubr.bf16.mxu0 0
          %762 = vmatmul.mubr.bf16.gmra.mxu0 %v659
          %v763 = vpop.f32.mrf.mxu0
          %v764 = vadd.f32 %v677, %v763
          %v765 = vpop.f32.mrf.mxu0
          %v766 = vpop.f32.mrf.mxu0
          %v767 = vadd.f32 %v678, %v766
          %v768 = vpop.f32.mrf.mxu0
          %769 = vmatprep.mubr.bf16.mxu0 0
          %770 = vmatmul.mubr.bf16.gmra.mxu0 %v660
          %v771 = vpop.f32.mrf.mxu0
          %v772 = vadd.f32 %v679, %v771
          %v773 = vpop.f32.mrf.mxu0
          %v774 = vpop.f32.mrf.mxu0
          %v775 = vadd.f32 %v680, %v774
          %v776 = vpop.f32.mrf.mxu0
          %777 = vdwg.mxu0
          %778 = vst [vmem:[#allocation2] sm:$0xff] %v764
          %779 = vst [vmem:[#allocation2 + $0x8] sm:$0xff] %v767
          %780 = vst [vmem:[#allocation2 + $0x10] sm:$0xff] %v772
          %781 = vst [vmem:[#allocation2 + $0x18] sm:$0xff] %v775
        $region92: #{model_with_intermediate_layers.1} parent=63 // pred_fallthru
          _
        %v782 = vld [vmem:[#allocation2] sm:$0xff]
        %v783 = vld [vmem:[#allocation2 + $0x8] sm:$0xff]
        %v784 = vld [vmem:[#allocation2 + $0x10] sm:$0xff]
        %v785 = vld [vmem:[#allocation2 + $0x18] sm:$0xff]
        %v786 = vld [vmem:[%s531] sm:$0xff]
        %v787 = vld [vmem:[%s531 + $0x8] sm:$0xff]
        %788 = vadd.xlane.f32.xlu0 %v782
        %v789 = vpop.xlane.xlu0 %788
        %790 = vadd.xlane.f32.xlu0 %v783
        %v791 = vpop.xlane.xlu0 %790
        %792 = vadd.xlane.f32.xlu0 %v784
        %v793 = vpop.xlane.xlu0 %792
        %794 = vadd.xlane.f32.xlu0 %v785
        %v795 = vpop.xlane.xlu0 %794
        %v796 = vrcp.pop 128.0
        %v797 = vmul.f32 %v789, %v796
        %v798 = vmul.f32 %v791, %v796
        %v799 = vmul.f32 %v793, %v796
        %v800 = vmul.f32 %v795, %v796
        %v801 = vsub.f32 %v782, %v797
        %v802 = vsub.f32 %v783, %v798
        %v803 = vsub.f32 %v784, %v799
        %v804 = vsub.f32 %v785, %v800
        %v805 = vmul.f32 %v801, %v801
        %v806 = vmul.f32 %v802, %v802
        %v807 = vmul.f32 %v803, %v803
        %v808 = vmul.f32 %v804, %v804
        %809 = vadd.xlane.f32.xlu0 %v805
        %v810 = vpop.xlane.xlu0 %809
        %811 = vadd.xlane.f32.xlu0 %v806
        %v812 = vpop.xlane.xlu0 %811
        %813 = vadd.xlane.f32.xlu0 %v807
        %v814 = vpop.xlane.xlu0 %813
        %815 = vadd.xlane.f32.xlu0 %v808
        %v816 = vpop.xlane.xlu0 %815
        %v817 = vmul.f32 %v810, %v796
        %v818 = vmul.f32 %v812, %v796
        %v819 = vmul.f32 %v814, %v796
        %v820 = vmul.f32 %v816, %v796
        %v821 = vadd.f32 %v817, 1e-06
        %v822 = vadd.f32 %v818, 1e-06
        %v823 = vadd.f32 %v819, 1e-06
        %v824 = vadd.f32 %v820, 1e-06
        %v825 = vrsqrt.pop %v821
        %v826 = vrsqrt.pop %v822
        %v827 = vrsqrt.pop %v823
        %v828 = vrsqrt.pop %v824
        %v829 = vmul.f32 %v801, %v825
        %v830 = vmul.f32 %v802, %v826
        %v831 = vmul.f32 %v803, %v827
        %v832 = vmul.f32 %v804, %v828
        %v833 = vlaneseq
        %v834 = vshrl.u32 %v833, 7
        %v835 = vsub.s32 0, %v834
        %v836 = vrot.slane %v786, %v835
        %v837 = vmul.f32 %v829, %v836
        %v838 = vmul.f32 %v830, %v836
        %v839 = vmul.f32 %v831, %v836
        %v840 = vmul.f32 %v832, %v836
        %v841 = vlaneseq
        %v842 = vshrl.u32 %v841, 7
        %v843 = vsub.s32 1, %v842
        %v844 = vrot.slane %v786, %v843
        %v845 = vadd.f32 %v837, %v844
        %v846 = vadd.f32 %v838, %v844
        %v847 = vadd.f32 %v839, %v844
        %v848 = vadd.f32 %v840, %v844
        %v849 = vpack.c.bf16 %v846, %v845
        %v850 = vpack.c.bf16 %v848, %v847
        %v851 = vld [vmem:[%s522] sm:$0xff]
        %v852 = vld [vmem:[%s522 + $0x8] sm:$0xf]
        %v853 = vld [vmem:[%s522 + $0xc] sm:$0xff]
        %v854 = vld [vmem:[%s522 + $0x14] sm:$0xf]
        %v855 = vld [vmem:[%s522 + $0x18] sm:$0xff]
        %v856 = vld [vmem:[%s522 + $0x20] sm:$0xf]
        %v857 = vld [vmem:[%s522 + $0x24] sm:$0xff]
        %v858 = vld [vmem:[%s522 + $0x2c] sm:$0xf]
        %v859 = vld [vmem:[%s522 + $0x30] sm:$0xff]
        %v860 = vld [vmem:[%s522 + $0x38] sm:$0xf]
        %v861 = vld [vmem:[%s522 + $0x3c] sm:$0xff]
        %v862 = vld [vmem:[%s522 + $0x44] sm:$0xf]
        %v863 = vld [vmem:[%s522 + $0x48] sm:$0xff]
        %v864 = vld [vmem:[%s522 + $0x50] sm:$0xf]
        %v865 = vld [vmem:[%s522 + $0x54] sm:$0xff]
        %v866 = vld [vmem:[%s522 + $0x5c] sm:$0xf]
        %v867 = vld [vmem:[%s522 + $0x60] sm:$0xff]
        %v868 = vld [vmem:[%s522 + $0x68] sm:$0xf]
        %v869 = vld [vmem:[%s522 + $0x6c] sm:$0xff]
        %v870 = vld [vmem:[%s522 + $0x74] sm:$0xf]
        %v871 = vld [vmem:[%s522 + $0x78] sm:$0xff]
        %v872 = vld [vmem:[%s522 + $0x80] sm:$0xf]
        %v873 = vld [vmem:[%s522 + $0x84] sm:$0xff]
        %v874 = vld [vmem:[%s522 + $0x8c] sm:$0xf]
        %v875 = vld [vmem:[%s522 + $0x90] sm:$0xff]
        %v876 = vld [vmem:[%s522 + $0x98] sm:$0xf]
        %v877 = vld [vmem:[%s522 + $0x9c] sm:$0xff]
        %v878 = vld [vmem:[%s522 + $0xa4] sm:$0xf]
        %v879 = vld [vmem:[%s522 + $0xa8] sm:$0xff]
        %v880 = vld [vmem:[%s522 + $0xb0] sm:$0xf]
        %v881 = vld [vmem:[%s522 + $0xb4] sm:$0xff]
        %v882 = vld [vmem:[%s522 + $0xbc] sm:$0xf]
        %v915 = vunpack.c.l.b16 %v851
        %v916 = vunpack.c.h.b16 %v851
        %v917 = vunpack.c.l.b16 %v852
        %v918 = vunpack.c.l.b16 %v853
        %v919 = vunpack.c.h.b16 %v853
        %v920 = vunpack.c.l.b16 %v854
        %v921 = vunpack.c.l.b16 %v855
        %v922 = vunpack.c.h.b16 %v855
        %v923 = vunpack.c.l.b16 %v856
        %v924 = vunpack.c.l.b16 %v857
        %v925 = vunpack.c.h.b16 %v857
        %v926 = vunpack.c.l.b16 %v858
        %v927 = vunpack.c.l.b16 %v859
        %v928 = vunpack.c.h.b16 %v859
        %v929 = vunpack.c.l.b16 %v860
        %v930 = vunpack.c.l.b16 %v861
        %v931 = vunpack.c.h.b16 %v861
        %v932 = vunpack.c.l.b16 %v862
        %v933 = vunpack.c.l.b16 %v863
        %v934 = vunpack.c.h.b16 %v863
        %v935 = vunpack.c.l.b16 %v864
        %v936 = vunpack.c.l.b16 %v865
        %v937 = vunpack.c.h.b16 %v865
        %v938 = vunpack.c.l.b16 %v866
        %v939 = vunpack.c.l.b16 %v867
        %v940 = vunpack.c.h.b16 %v867
        %v941 = vunpack.c.l.b16 %v868
        %v942 = vunpack.c.l.b16 %v869
        %v943 = vunpack.c.h.b16 %v869
        %v944 = vunpack.c.l.b16 %v870
        %v945 = vunpack.c.l.b16 %v871
        %v946 = vunpack.c.h.b16 %v871
        %v947 = vunpack.c.l.b16 %v872
        %v948 = vunpack.c.l.b16 %v873
        %v949 = vunpack.c.h.b16 %v873
        %v950 = vunpack.c.l.b16 %v874
        %v951 = vunpack.c.l.b16 %v875
        %v952 = vunpack.c.h.b16 %v875
        %v953 = vunpack.c.l.b16 %v876
        %v954 = vunpack.c.l.b16 %v877
        %v955 = vunpack.c.h.b16 %v877
        %v956 = vunpack.c.l.b16 %v878
        %v957 = vunpack.c.l.b16 %v879
        %v958 = vunpack.c.h.b16 %v879
        %v959 = vunpack.c.l.b16 %v880
        %v960 = vunpack.c.l.b16 %v881
        %v961 = vunpack.c.h.b16 %v881
        %v962 = vunpack.c.l.b16 %v882
        %v963 = vpack.c.b16 %v918, %v915
        %v964 = vpack.c.b16 %v919, %v916
        %v965 = vpack.c.b16 %v920, %v917
        %v966 = vpack.c.b16 %v924, %v921
        %v967 = vpack.c.b16 %v925, %v922
        %v968 = vpack.c.b16 %v926, %v923
        %v969 = vpack.c.b16 %v930, %v927
        %v970 = vpack.c.b16 %v931, %v928
        %v971 = vpack.c.b16 %v932, %v929
        %v972 = vpack.c.b16 %v936, %v933
        %v973 = vpack.c.b16 %v937, %v934
        %v974 = vpack.c.b16 %v938, %v935
        %v975 = vpack.c.b16 %v942, %v939
        %v976 = vpack.c.b16 %v943, %v940
        %v977 = vpack.c.b16 %v944, %v941
        %v978 = vpack.c.b16 %v948, %v945
        %v979 = vpack.c.b16 %v949, %v946
        %v980 = vpack.c.b16 %v950, %v947
        %v981 = vpack.c.b16 %v954, %v951
        %v982 = vpack.c.b16 %v955, %v952
        %v983 = vpack.c.b16 %v956, %v953
        %v984 = vpack.c.b16 %v960, %v957
        %v985 = vpack.c.b16 %v961, %v958
        %v986 = vpack.c.b16 %v962, %v959
        %1011 = vmatprep.subr.bf16.mxu0 %v985
        %1012 = vmatpush1.bf16.msra.mxu0 %v984
        %1013 = vmatprep.subr.bf16.mxu0 %v982
        %1014 = vmatpush1.bf16.msra.mxu0 %v981
        %1015 = vmatprep.subr.bf16.mxu0 %v979
        %1016 = vmatpush1.bf16.msra.mxu0 %v978
        %1017 = vmatprep.subr.bf16.mxu0 %v976
        %1018 = vmatpush1.bf16.msra.mxu0 %v975
        %1019 = vmatprep.subr.bf16.mxu0 %v973
        %1020 = vmatpush1.bf16.msra.mxu0 %v972
        %1021 = vmatprep.subr.bf16.mxu0 %v970
        %1022 = vmatpush1.bf16.msra.mxu0 %v969
        %1023 = vmatprep.subr.bf16.mxu0 %v967
        %1024 = vmatpush1.bf16.msra.mxu0 %v966
        %1025 = vmatprep.subr.bf16.mxu0 %v964
        %1026 = vmatpush1.bf16.msra.mxu0 %v963
        %1027 = vmatprep.subr.bf16.mxu0 0
        %1028 = vmatpush2.bf16.msra.mxu0 0
        %1029 = vmatprep.subr.bf16.mxu0 0
        %1030 = vmatpush2.bf16.msra.mxu0 0
        %1031 = vmatprep.subr.bf16.mxu0 0
        %1032 = vmatpush2.bf16.msra.mxu0 0
        %1033 = vmatprep.subr.bf16.mxu0 0
        %1034 = vmatpush2.bf16.msra.mxu0 0
        %1035 = vmatprep.subr.bf16.mxu0 0
        %1036 = vmatpush2.bf16.msra.mxu0 0
        %1037 = vmatprep.subr.bf16.mxu0 0
        %1038 = vmatpush2.bf16.msra.mxu0 0
        %1039 = vmatprep.subr.bf16.mxu0 0
        %1040 = vmatpush2.bf16.msra.mxu0 0
        %1041 = vmatprep.subr.bf16.mxu0 0
        %1042 = vmatpush2.bf16.msra.mxu0 0
        %1043 = vmatprep.mubr.bf16.mxu0 0
        %1044 = vmatmul.mubr.bf16.gmra.mxu0 %v849
        %v1045 = vpop.f32.mrf.mxu0
        %v1046 = vadd.f32 0.0, %v1045
        %v1047 = vpop.f32.mrf.mxu0
        %v1048 = vadd.f32 0.0, %v1047
        %v1049 = vpop.f32.mrf.mxu0
        %v1050 = vadd.f32 0.0, %v1049
        %v1051 = vpop.f32.mrf.mxu0
        %v1052 = vadd.f32 0.0, %v1051
        %1053 = vmatprep.mubr.bf16.mxu0 0
        %1054 = vmatmul.mubr.bf16.gmra.mxu0 %v850
        %v1055 = vpop.f32.mrf.mxu0
        %v1056 = vadd.f32 0.0, %v1055
        %v1057 = vpop.f32.mrf.mxu0
        %v1058 = vadd.f32 0.0, %v1057
        %v1059 = vpop.f32.mrf.mxu0
        %v1060 = vadd.f32 0.0, %v1059
        %v1061 = vpop.f32.mrf.mxu0
        %v1062 = vadd.f32 0.0, %v1061
        %1063 = vdwg.mxu0
        %1064 = vmatprep.subr.bf16.mxu0 0
        %1065 = vmatpush1.bf16.msra.mxu0 %v986
        %1066 = vmatprep.subr.bf16.mxu0 0
        %1067 = vmatpush1.bf16.msra.mxu0 %v983
        %1068 = vmatprep.subr.bf16.mxu0 0
        %1069 = vmatpush1.bf16.msra.mxu0 %v980
        %1070 = vmatprep.subr.bf16.mxu0 0
        %1071 = vmatpush1.bf16.msra.mxu0 %v977
        %1072 = vmatprep.subr.bf16.mxu0 0
        %1073 = vmatpush1.bf16.msra.mxu0 %v974
        %1074 = vmatprep.subr.bf16.mxu0 0
        %1075 = vmatpush1.bf16.msra.mxu0 %v971
        %1076 = vmatprep.subr.bf16.mxu0 0
        %1077 = vmatpush1.bf16.msra.mxu0 %v968
        %1078 = vmatprep.subr.bf16.mxu0 0
        %1079 = vmatpush1.bf16.msra.mxu0 %v965
        %1080 = vmatprep.subr.bf16.mxu0 0
        %1081 = vmatpush2.bf16.msra.mxu0 0
        %1082 = vmatprep.subr.bf16.mxu0 0
        %1083 = vmatpush2.bf16.msra.mxu0 0
        %1084 = vmatprep.subr.bf16.mxu0 0
        %1085 = vmatpush2.bf16.msra.mxu0 0
        %1086 = vmatprep.subr.bf16.mxu0 0
        %1087 = vmatpush2.bf16.msra.mxu0 0
        %1088 = vmatprep.subr.bf16.mxu0 0
        %1089 = vmatpush2.bf16.msra.mxu0 0
        %1090 = vmatprep.subr.bf16.mxu0 0
        %1091 = vmatpush2.bf16.msra.mxu0 0
        %1092 = vmatprep.subr.bf16.mxu0 0
        %1093 = vmatpush2.bf16.msra.mxu0 0
        %1094 = vmatprep.subr.bf16.mxu0 0
        %1095 = vmatpush2.bf16.msra.mxu0 0
        %1096 = vmatprep.mubr.bf16.mxu0 0
        %1097 = vmatmul.mubr.bf16.gmra.mxu0 %v849
        %v1098 = vpop.f32.mrf.mxu0
        %v1099 = vadd.f32 0.0, %v1098
        %v1100 = vpop.f32.mrf.mxu0
        %v1101 = vpop.f32.mrf.mxu0
        %v1102 = vadd.f32 0.0, %v1101
        %v1103 = vpop.f32.mrf.mxu0
        %1104 = vmatprep.mubr.bf16.mxu0 0
        %1105 = vmatmul.mubr.bf16.gmra.mxu0 %v850
        %v1106 = vpop.f32.mrf.mxu0
        %v1107 = vadd.f32 0.0, %v1106
        %v1108 = vpop.f32.mrf.mxu0
        %v1109 = vpop.f32.mrf.mxu0
        %v1110 = vadd.f32 0.0, %v1109
        %v1111 = vpop.f32.mrf.mxu0
        %1112 = vdwg.mxu0
        %v1113 = vlaneseq
        %v1114 = vshrl.u32 %v1113, 7
        %v1115 = vsub.s32 2, %v1114
        %v1116 = vrot.slane %v786, %v1115
        %v1117 = vadd.f32 %v1046, %v1116
        %v1118 = vadd.f32 %v1050, %v1116
        %v1119 = vadd.f32 %v1056, %v1116
        %v1120 = vadd.f32 %v1060, %v1116
        %v1121 = vlaneseq
        %v1122 = vshrl.u32 %v1121, 7
        %v1123 = vsub.s32 3, %v1122
        %v1124 = vrot.slane %v786, %v1123
        %v1125 = vadd.f32 %v1048, %v1124
        %v1126 = vadd.f32 %v1052, %v1124
        %v1127 = vadd.f32 %v1058, %v1124
        %v1128 = vadd.f32 %v1062, %v1124
        %v1129 = vlaneseq
        %v1130 = vshrl.u32 %v1129, 7
        %v1131 = vsub.s32 4, %v1130
        %v1132 = vrot.slane %v786, %v1131
        %v1133 = vadd.f32 %v1099, %v1132
        %v1134 = vadd.f32 %v1102, %v1132
        %v1135 = vadd.f32 %v1107, %v1132
        %v1136 = vadd.f32 %v1110, %v1132
        %v1137 = vld [vmem:[#allocation3] sm:$0xff]
        %v1138 = vld [vmem:[#allocation3 + $0x8] sm:$0xff]
        %v1139 = vld [vmem:[#allocation3 + $0x10] sm:$0xff]
        %v1140 = vld [vmem:[#allocation3 + $0x18] sm:$0xff]
        %v1141 = vpack.c.bf16 %v1118, %v1117
        %v1142 = vpack.c.bf16 %v1120, %v1119
        %v1143 = vpack.c.bf16 %v1126, %v1125
        %v1144 = vpack.c.bf16 %v1128, %v1127
        %v1145 = vpack.c.bf16 %v1134, %v1133
        %v1146 = vpack.c.bf16 %v1136, %v1135
        %vm1147 = vcmask 523264
        %v1149 = vsel %vm1147, %v1141, 0
        %v1152 = vsel %vm1147, %v1142, 0
        %v1155 = vsel %vm1147, %v1143, 0
        %v1158 = vsel %vm1147, %v1144, 0
        %1160 = vmatprep.subr.bf16.mxu0 0
        %1161 = vmatpush1.bf16.xpose.msra.mxu0 0
        %1162 = vmatprep.subr.bf16.mxu0 0
        %1163 = vmatpush1.bf16.xpose.msra.mxu0 0
        %1164 = vmatprep.subr.bf16.mxu0 0
        %1165 = vmatpush1.bf16.xpose.msra.mxu0 0
        %1166 = vmatprep.subr.bf16.mxu0 0
        %1167 = vmatpush1.bf16.xpose.msra.mxu0 0
        %1168 = vmatprep.subr.bf16.mxu0 0
        %1169 = vmatpush1.bf16.xpose.msra.mxu0 0
        %1170 = vmatprep.subr.bf16.mxu0 0
        %1171 = vmatpush1.bf16.xpose.msra.mxu0 0
        %1172 = vmatprep.subr.bf16.mxu0 0
        %1173 = vmatpush1.bf16.xpose.msra.mxu0 %v1158
        %1174 = vmatprep.subr.bf16.mxu0 0
        %1175 = vmatpush1.bf16.xpose.msra.mxu0 %v1155
        %1176 = vmatprep.subr.bf16.mxu0 0
        %1177 = vmatpush2.bf16.xpose.msra.mxu0 0
        %1178 = vmatprep.subr.bf16.mxu0 0
        %1179 = vmatpush2.bf16.xpose.msra.mxu0 0
        %1180 = vmatprep.subr.bf16.mxu0 0
        %1181 = vmatpush2.bf16.xpose.msra.mxu0 0
        %1182 = vmatprep.subr.bf16.mxu0 0
        %1183 = vmatpush2.bf16.xpose.msra.mxu0 0
        %1184 = vmatprep.subr.bf16.mxu0 0
        %1185 = vmatpush2.bf16.xpose.msra.mxu0 0
        %1186 = vmatprep.subr.bf16.mxu0 0
        %1187 = vmatpush2.bf16.xpose.msra.mxu0 0
        %1188 = vmatprep.subr.bf16.mxu0 0
        %1189 = vmatpush2.bf16.xpose.msra.mxu0 0
        %1190 = vmatprep.subr.bf16.mxu0 0
        %1191 = vmatpush2.bf16.xpose.msra.mxu0 0
        %1192 = vmatprep.mubr.bf16.mxu0 0
        %1193 = vmatmul.mubr.bf16.gmra.mxu0 %v1149
        %v1194 = vpop.f32.mrf.mxu0
        %v1195 = vadd.f32 %v1137, %v1194
        %v1196 = vpop.f32.mrf.mxu0
        %v1197 = vpop.f32.mrf.mxu0
        %v1198 = vadd.f32 %v1138, %v1197
        %v1199 = vpop.f32.mrf.mxu0
        %1200 = vmatprep.mubr.bf16.mxu0 0
        %1201 = vmatmul.mubr.bf16.gmra.mxu0 %v1152
        %v1202 = vpop.f32.mrf.mxu0
        %v1203 = vadd.f32 %v1139, %v1202
        %v1204 = vpop.f32.mrf.mxu0
        %v1205 = vpop.f32.mrf.mxu0
        %v1206 = vadd.f32 %v1140, %v1205
        %v1207 = vpop.f32.mrf.mxu0
        %1208 = vdwg.mxu0
        %vm1209 = vcmask 261120
        %v1210 = vsel %vm1209, %v1195, -inf
        %1211 = vmax.xlane.f32.xlu0 %v1210
        %v1212 = vpop.xlane.xlu0 %1211
        %v1213 = vsel %vm1209, %v1198, -inf
        %1214 = vmax.xlane.f32.xlu0 %v1213
        %v1215 = vpop.xlane.xlu0 %1214
        %v1216 = vsel %vm1209, %v1203, -inf
        %1217 = vmax.xlane.f32.xlu0 %v1216
        %v1218 = vpop.xlane.xlu0 %1217
        %v1219 = vsel %vm1209, %v1206, -inf
        %1220 = vmax.xlane.f32.xlu0 %v1219
        %v1221 = vpop.xlane.xlu0 %1220
        %v1222 = vsub.f32 %v1195, %v1212
        %v1223 = vsub.f32 %v1198, %v1215
        %v1224 = vsub.f32 %v1203, %v1218
        %v1225 = vsub.f32 %v1206, %v1221
        %v1226 = vmul.f32 %v1222, 1.442695
        %v1227 = vpow.pop %v1226
        %v1228 = vmul.f32 %v1223, 1.442695
        %v1229 = vpow.pop %v1228
        %v1230 = vmul.f32 %v1224, 1.442695
        %v1231 = vpow.pop %v1230
        %v1232 = vmul.f32 %v1225, 1.442695
        %v1233 = vpow.pop %v1232
        %v1234 = vsel %vm1209, %v1227, 0.0
        %1235 = vadd.xlane.f32.xlu0 %v1234
        %v1236 = vpop.xlane.xlu0 %1235
        %v1237 = vsel %vm1209, %v1229, 0.0
        %1238 = vadd.xlane.f32.xlu0 %v1237
        %v1239 = vpop.xlane.xlu0 %1238
        %v1240 = vsel %vm1209, %v1231, 0.0
        %1241 = vadd.xlane.f32.xlu0 %v1240
        %v1242 = vpop.xlane.xlu0 %1241
        %v1243 = vsel %vm1209, %v1233, 0.0
        %1244 = vadd.xlane.f32.xlu0 %v1243
        %v1245 = vpop.xlane.xlu0 %1244
        %v1246 = vrcp.pop %v1236
        %v1247 = vrcp.pop %v1239
        %v1248 = vrcp.pop %v1242
        %v1249 = vrcp.pop %v1245
        %v1250 = vmul.f32 %v1227, %v1246
        %v1251 = vmul.f32 %v1229, %v1247
        %v1252 = vmul.f32 %v1231, %v1248
        %v1253 = vmul.f32 %v1233, %v1249
        %v1254 = vpack.c.bf16 %v1251, %v1250
        %v1255 = vpack.c.bf16 %v1253, %v1252
        %v1257 = vsel %vm1209, %v1254, 0
        %v1260 = vsel %vm1209, %v1255, 0
        %1262 = vmatprep.subr.bf16.mxu0 0
        %1263 = vmatpush1.bf16.msra.mxu0 0
        %1264 = vmatprep.subr.bf16.mxu0 0
        %1265 = vmatpush1.bf16.msra.mxu0 0
        %1266 = vmatprep.subr.bf16.mxu0 0
        %1267 = vmatpush1.bf16.msra.mxu0 0
        %1268 = vmatprep.subr.bf16.mxu0 0
        %1269 = vmatpush1.bf16.msra.mxu0 0
        %1270 = vmatprep.subr.bf16.mxu0 0
        %1271 = vmatpush1.bf16.msra.mxu0 0
        %1272 = vmatprep.subr.bf16.mxu0 0
        %1273 = vmatpush1.bf16.msra.mxu0 0
        %1274 = vmatprep.subr.bf16.mxu0 0
        %1275 = vmatpush1.bf16.msra.mxu0 %v1146
        %1276 = vmatprep.subr.bf16.mxu0 0
        %1277 = vmatpush1.bf16.msra.mxu0 %v1145
        %1278 = vmatprep.subr.bf16.mxu0 0
        %1279 = vmatpush2.bf16.msra.mxu0 0
        %1280 = vmatprep.subr.bf16.mxu0 0
        %1281 = vmatpush2.bf16.msra.mxu0 0
        %1282 = vmatprep.subr.bf16.mxu0 0
        %1283 = vmatpush2.bf16.msra.mxu0 0
        %1284 = vmatprep.subr.bf16.mxu0 0
        %1285 = vmatpush2.bf16.msra.mxu0 0
        %1286 = vmatprep.subr.bf16.mxu0 0
        %1287 = vmatpush2.bf16.msra.mxu0 0
        %1288 = vmatprep.subr.bf16.mxu0 0
        %1289 = vmatpush2.bf16.msra.mxu0 0
        %1290 = vmatprep.subr.bf16.mxu0 0
        %1291 = vmatpush2.bf16.msra.mxu0 0
        %1292 = vmatprep.subr.bf16.mxu0 0
        %1293 = vmatpush2.bf16.msra.mxu0 0
        %1294 = vmatprep.mubr.bf16.mxu0 0
        %1295 = vmatmul.mubr.bf16.gmra.mxu0 %v1257
        %v1296 = vpop.f32.mrf.mxu0
        %v1297 = vadd.f32 0.0, %v1296
        %v1298 = vpop.f32.mrf.mxu0
        %v1299 = vpop.f32.mrf.mxu0
        %v1300 = vadd.f32 0.0, %v1299
        %v1301 = vpop.f32.mrf.mxu0
        %1302 = vmatprep.mubr.bf16.mxu0 0
        %1303 = vmatmul.mubr.bf16.gmra.mxu0 %v1260
        %v1304 = vpop.f32.mrf.mxu0
        %v1305 = vadd.f32 0.0, %v1304
        %v1306 = vpop.f32.mrf.mxu0
        %v1307 = vpop.f32.mrf.mxu0
        %v1308 = vadd.f32 0.0, %v1307
        %v1309 = vpop.f32.mrf.mxu0
        %1310 = vdwg.mxu0
        %1313 = vrot.lane.b32.xlu0 %v1141, 64
        %v1314 = vpop.permute.xlu0 %1313
        %1315 = vrot.lane.b32.xlu0 %v1142, 64
        %v1316 = vpop.permute.xlu0 %1315
        %1319 = vrot.lane.b32.xlu0 %v1143, 64
        %v1320 = vpop.permute.xlu0 %1319
        %1321 = vrot.lane.b32.xlu0 %v1144, 64
        %v1322 = vpop.permute.xlu0 %1321
        %v1324 = vsel %vm1147, %v1314, 0
        %v1327 = vsel %vm1147, %v1316, 0
        %v1330 = vsel %vm1147, %v1320, 0
        %v1333 = vsel %vm1147, %v1322, 0
        %1335 = vmatprep.subr.bf16.mxu0 0
        %1336 = vmatpush1.bf16.xpose.msra.mxu0 0
        %1337 = vmatprep.subr.bf16.mxu0 0
        %1338 = vmatpush1.bf16.xpose.msra.mxu0 0
        %1339 = vmatprep.subr.bf16.mxu0 0
        %1340 = vmatpush1.bf16.xpose.msra.mxu0 0
        %1341 = vmatprep.subr.bf16.mxu0 0
        %1342 = vmatpush1.bf16.xpose.msra.mxu0 0
        %1343 = vmatprep.subr.bf16.mxu0 0
        %1344 = vmatpush1.bf16.xpose.msra.mxu0 0
        %1345 = vmatprep.subr.bf16.mxu0 0
        %1346 = vmatpush1.bf16.xpose.msra.mxu0 0
        %1347 = vmatprep.subr.bf16.mxu0 0
        %1348 = vmatpush1.bf16.xpose.msra.mxu0 %v1333
        %1349 = vmatprep.subr.bf16.mxu0 0
        %1350 = vmatpush1.bf16.xpose.msra.mxu0 %v1330
        %1351 = vmatprep.subr.bf16.mxu0 0
        %1352 = vmatpush2.bf16.xpose.msra.mxu0 0
        %1353 = vmatprep.subr.bf16.mxu0 0
        %1354 = vmatpush2.bf16.xpose.msra.mxu0 0
        %1355 = vmatprep.subr.bf16.mxu0 0
        %1356 = vmatpush2.bf16.xpose.msra.mxu0 0
        %1357 = vmatprep.subr.bf16.mxu0 0
        %1358 = vmatpush2.bf16.xpose.msra.mxu0 0
        %1359 = vmatprep.subr.bf16.mxu0 0
        %1360 = vmatpush2.bf16.xpose.msra.mxu0 0
        %1361 = vmatprep.subr.bf16.mxu0 0
        %1362 = vmatpush2.bf16.xpose.msra.mxu0 0
        %1363 = vmatprep.subr.bf16.mxu0 0
        %1364 = vmatpush2.bf16.xpose.msra.mxu0 0
        %1365 = vmatprep.subr.bf16.mxu0 0
        %1366 = vmatpush2.bf16.xpose.msra.mxu0 0
        %1367 = vmatprep.mubr.bf16.mxu0 0
        %1368 = vmatmul.mubr.bf16.gmra.mxu0 %v1324
        %v1369 = vpop.f32.mrf.mxu0
        %v1370 = vadd.f32 %v1137, %v1369
        %v1371 = vpop.f32.mrf.mxu0
        %v1372 = vpop.f32.mrf.mxu0
        %v1373 = vadd.f32 %v1138, %v1372
        %v1374 = vpop.f32.mrf.mxu0
        %1375 = vmatprep.mubr.bf16.mxu0 0
        %1376 = vmatmul.mubr.bf16.gmra.mxu0 %v1327
        %v1377 = vpop.f32.mrf.mxu0
        %v1378 = vadd.f32 %v1139, %v1377
        %v1379 = vpop.f32.mrf.mxu0
        %v1380 = vpop.f32.mrf.mxu0
        %v1381 = vadd.f32 %v1140, %v1380
        %v1382 = vpop.f32.mrf.mxu0
        %1383 = vdwg.mxu0
        %v1384 = vsel %vm1209, %v1370, -inf
        %1385 = vmax.xlane.f32.xlu0 %v1384
        %v1386 = vpop.xlane.xlu0 %1385
        %v1387 = vsel %vm1209, %v1373, -inf
        %1388 = vmax.xlane.f32.xlu0 %v1387
        %v1389 = vpop.xlane.xlu0 %1388
        %v1390 = vsel %vm1209, %v1378, -inf
        %1391 = vmax.xlane.f32.xlu0 %v1390
        %v1392 = vpop.xlane.xlu0 %1391
        %v1393 = vsel %vm1209, %v1381, -inf
        %1394 = vmax.xlane.f32.xlu0 %v1393
        %v1395 = vpop.xlane.xlu0 %1394
        %v1396 = vsub.f32 %v1370, %v1386
        %v1397 = vsub.f32 %v1373, %v1389
        %v1398 = vsub.f32 %v1378, %v1392
        %v1399 = vsub.f32 %v1381, %v1395
        %v1400 = vmul.f32 %v1396, 1.442695
        %v1401 = vpow.pop %v1400
        %v1402 = vmul.f32 %v1397, 1.442695
        %v1403 = vpow.pop %v1402
        %v1404 = vmul.f32 %v1398, 1.442695
        %v1405 = vpow.pop %v1404
        %v1406 = vmul.f32 %v1399, 1.442695
        %v1407 = vpow.pop %v1406
        %v1408 = vsel %vm1209, %v1401, 0.0
        %1409 = vadd.xlane.f32.xlu0 %v1408
        %v1410 = vpop.xlane.xlu0 %1409
        %v1411 = vsel %vm1209, %v1403, 0.0
        %1412 = vadd.xlane.f32.xlu0 %v1411
        %v1413 = vpop.xlane.xlu0 %1412
        %v1414 = vsel %vm1209, %v1405, 0.0
        %1415 = vadd.xlane.f32.xlu0 %v1414
        %v1416 = vpop.xlane.xlu0 %1415
        %v1417 = vsel %vm1209, %v1407, 0.0
        %1418 = vadd.xlane.f32.xlu0 %v1417
        %v1419 = vpop.xlane.xlu0 %1418
        %v1420 = vrcp.pop %v1410
        %v1421 = vrcp.pop %v1413
        %v1422 = vrcp.pop %v1416
        %v1423 = vrcp.pop %v1419
        %v1424 = vmul.f32 %v1401, %v1420
        %v1425 = vmul.f32 %v1403, %v1421
        %v1426 = vmul.f32 %v1405, %v1422
        %v1427 = vmul.f32 %v1407, %v1423
        %v1428 = vpack.c.bf16 %v1425, %v1424
        %v1429 = vpack.c.bf16 %v1427, %v1426
        %1432 = vrot.lane.b32.xlu0 %v1145, 64
        %v1433 = vpop.permute.xlu0 %1432
        %1434 = vrot.lane.b32.xlu0 %v1146, 64
        %v1435 = vpop.permute.xlu0 %1434
        %v1439 = vsel %vm1209, %v1428, 0
        %v1442 = vsel %vm1209, %v1429, 0
        %1444 = vmatprep.subr.bf16.mxu0 0
        %1445 = vmatpush1.bf16.msra.mxu0 0
        %1446 = vmatprep.subr.bf16.mxu0 0
        %1447 = vmatpush1.bf16.msra.mxu0 0
        %1448 = vmatprep.subr.bf16.mxu0 0
        %1449 = vmatpush1.bf16.msra.mxu0 0
        %1450 = vmatprep.subr.bf16.mxu0 0
        %1451 = vmatpush1.bf16.msra.mxu0 0
        %1452 = vmatprep.subr.bf16.mxu0 0
        %1453 = vmatpush1.bf16.msra.mxu0 0
        %1454 = vmatprep.subr.bf16.mxu0 0
        %1455 = vmatpush1.bf16.msra.mxu0 0
        %1456 = vmatprep.subr.bf16.mxu0 0
        %1457 = vmatpush1.bf16.msra.mxu0 %v1435
        %1458 = vmatprep.subr.bf16.mxu0 0
        %1459 = vmatpush1.bf16.msra.mxu0 %v1433
        %1460 = vmatprep.subr.bf16.mxu0 0
        %1461 = vmatpush2.bf16.msra.mxu0 0
        %1462 = vmatprep.subr.bf16.mxu0 0
        %1463 = vmatpush2.bf16.msra.mxu0 0
        %1464 = vmatprep.subr.bf16.mxu0 0
        %1465 = vmatpush2.bf16.msra.mxu0 0
        %1466 = vmatprep.subr.bf16.mxu0 0
        %1467 = vmatpush2.bf16.msra.mxu0 0
        %1468 = vmatprep.subr.bf16.mxu0 0
        %1469 = vmatpush2.bf16.msra.mxu0 0
        %1470 = vmatprep.subr.bf16.mxu0 0
        %1471 = vmatpush2.bf16.msra.mxu0 0
        %1472 = vmatprep.subr.bf16.mxu0 0
        %1473 = vmatpush2.bf16.msra.mxu0 0
        %1474 = vmatprep.subr.bf16.mxu0 0
        %1475 = vmatpush2.bf16.msra.mxu0 0
        %1476 = vmatprep.mubr.bf16.mxu0 0
        %1477 = vmatmul.mubr.bf16.gmra.mxu0 %v1439
        %v1478 = vpop.f32.mrf.mxu0
        %v1479 = vadd.f32 0.0, %v1478
        %v1480 = vpop.f32.mrf.mxu0
        %v1481 = vpop.f32.mrf.mxu0
        %v1482 = vadd.f32 0.0, %v1481
        %v1483 = vpop.f32.mrf.mxu0
        %1484 = vmatprep.mubr.bf16.mxu0 0
        %1485 = vmatmul.mubr.bf16.gmra.mxu0 %v1442
        %v1486 = vpop.f32.mrf.mxu0
        %v1487 = vadd.f32 0.0, %v1486
        %v1488 = vpop.f32.mrf.mxu0
        %v1489 = vpop.f32.mrf.mxu0
        %v1490 = vadd.f32 0.0, %v1489
        %v1491 = vpop.f32.mrf.mxu0
        %1492 = vdwg.mxu0
        %1497 = vrot.lane.b32.xlu0 %v1479, 64
        %v1498 = vpop.permute.xlu0 %1497
        %1499 = vrot.lane.b32.xlu0 %v1482, 64
        %v1500 = vpop.permute.xlu0 %1499
        %1501 = vrot.lane.b32.xlu0 %v1487, 64
        %v1502 = vpop.permute.xlu0 %1501
        %1503 = vrot.lane.b32.xlu0 %v1490, 64
        %v1504 = vpop.permute.xlu0 %1503
        %v1509 = vsel %vm1147, %v1297, %v1498
        %v1510 = vsel %vm1147, %v1300, %v1500
        %v1511 = vsel %vm1147, %v1305, %v1502
        %v1512 = vsel %vm1147, %v1308, %v1504
        %v1513 = vpack.c.bf16 %v1510, %v1509
        %v1514 = vpack.c.bf16 %v1512, %v1511
        %v1515 = vld [vmem:[%s629] sm:$0xf]
        %v1516 = vld [vmem:[%s629 + $0x4] sm:$0xf]
        %v1517 = vld [vmem:[%s629 + $0x8] sm:$0xf]
        %v1518 = vld [vmem:[%s629 + $0xc] sm:$0xf]
        %v1519 = vld [vmem:[%s629 + $0x10] sm:$0xf]
        %v1520 = vld [vmem:[%s629 + $0x14] sm:$0xf]
        %v1521 = vld [vmem:[%s629 + $0x18] sm:$0xf]
        %v1522 = vld [vmem:[%s629 + $0x1c] sm:$0xf]
        %v1523 = vld [vmem:[%s629 + $0x20] sm:$0xf]
        %v1524 = vld [vmem:[%s629 + $0x24] sm:$0xf]
        %v1525 = vld [vmem:[%s629 + $0x28] sm:$0xf]
        %v1526 = vld [vmem:[%s629 + $0x2c] sm:$0xf]
        %v1527 = vld [vmem:[%s629 + $0x30] sm:$0xf]
        %v1528 = vld [vmem:[%s629 + $0x34] sm:$0xf]
        %v1529 = vld [vmem:[%s629 + $0x38] sm:$0xf]
        %v1530 = vld [vmem:[%s629 + $0x3c] sm:$0xf]
        %v1531 = vlaneseq
        %v1532 = vshrl.u32 %v1531, 7
        %v1533 = vsub.s32 5, %v1532
        %v1534 = vrot.slane %v786, %v1533
        %v1551 = vunpack.c.l.b16 %v1515
        %v1552 = vunpack.c.l.b16 %v1516
        %v1553 = vunpack.c.l.b16 %v1517
        %v1554 = vunpack.c.l.b16 %v1518
        %v1555 = vunpack.c.l.b16 %v1519
        %v1556 = vunpack.c.l.b16 %v1520
        %v1557 = vunpack.c.l.b16 %v1521
        %v1558 = vunpack.c.l.b16 %v1522
        %v1559 = vunpack.c.l.b16 %v1523
        %v1560 = vunpack.c.l.b16 %v1524
        %v1561 = vunpack.c.l.b16 %v1525
        %v1562 = vunpack.c.l.b16 %v1526
        %v1563 = vunpack.c.l.b16 %v1527
        %v1564 = vunpack.c.l.b16 %v1528
        %v1565 = vunpack.c.l.b16 %v1529
        %v1566 = vunpack.c.l.b16 %v1530
        %v1567 = vpack.c.b16 %v1552, %v1551
        %v1568 = vpack.c.b16 %v1554, %v1553
        %v1569 = vpack.c.b16 %v1556, %v1555
        %v1570 = vpack.c.b16 %v1558, %v1557
        %v1571 = vpack.c.b16 %v1560, %v1559
        %v1572 = vpack.c.b16 %v1562, %v1561
        %v1573 = vpack.c.b16 %v1564, %v1563
        %v1574 = vpack.c.b16 %v1566, %v1565
        %1583 = vmatprep.subr.bf16.mxu0 0
        %1584 = vmatpush1.bf16.msra.mxu0 %v1574
        %1585 = vmatprep.subr.bf16.mxu0 0
        %1586 = vmatpush1.bf16.msra.mxu0 %v1573
        %1587 = vmatprep.subr.bf16.mxu0 0
        %1588 = vmatpush1.bf16.msra.mxu0 %v1572
        %1589 = vmatprep.subr.bf16.mxu0 0
        %1590 = vmatpush1.bf16.msra.mxu0 %v1571
        %1591 = vmatprep.subr.bf16.mxu0 0
        %1592 = vmatpush1.bf16.msra.mxu0 %v1570
        %1593 = vmatprep.subr.bf16.mxu0 0
        %1594 = vmatpush1.bf16.msra.mxu0 %v1569
        %1595 = vmatprep.subr.bf16.mxu0 0
        %1596 = vmatpush1.bf16.msra.mxu0 %v1568
        %1597 = vmatprep.subr.bf16.mxu0 0
        %1598 = vmatpush1.bf16.msra.mxu0 %v1567
        %1599 = vmatprep.subr.bf16.mxu0 0
        %1600 = vmatpush2.bf16.msra.mxu0 0
        %1601 = vmatprep.subr.bf16.mxu0 0
        %1602 = vmatpush2.bf16.msra.mxu0 0
        %1603 = vmatprep.subr.bf16.mxu0 0
        %1604 = vmatpush2.bf16.msra.mxu0 0
        %1605 = vmatprep.subr.bf16.mxu0 0
        %1606 = vmatpush2.bf16.msra.mxu0 0
        %1607 = vmatprep.subr.bf16.mxu0 0
        %1608 = vmatpush2.bf16.msra.mxu0 0
        %1609 = vmatprep.subr.bf16.mxu0 0
        %1610 = vmatpush2.bf16.msra.mxu0 0
        %1611 = vmatprep.subr.bf16.mxu0 0
        %1612 = vmatpush2.bf16.msra.mxu0 0
        %1613 = vmatprep.subr.bf16.mxu0 0
        %1614 = vmatpush2.bf16.msra.mxu0 0
        %1615 = vmatprep.mubr.bf16.mxu0 0
        %1616 = vmatmul.mubr.bf16.gmra.mxu0 %v1513
        %v1617 = vpop.f32.mrf.mxu0
        %v1618 = vadd.f32 %v1534, %v1617
        %v1619 = vpop.f32.mrf.mxu0
        %v1620 = vpop.f32.mrf.mxu0
        %v1621 = vadd.f32 %v1534, %v1620
        %v1622 = vpop.f32.mrf.mxu0
        %1623 = vmatprep.mubr.bf16.mxu0 0
        %1624 = vmatmul.mubr.bf16.gmra.mxu0 %v1514
        %v1625 = vpop.f32.mrf.mxu0
        %v1626 = vadd.f32 %v1534, %v1625
        %v1627 = vpop.f32.mrf.mxu0
        %v1628 = vpop.f32.mrf.mxu0
        %v1629 = vadd.f32 %v1534, %v1628
        %v1630 = vpop.f32.mrf.mxu0
        %1631 = vdwg.mxu0
        %v1632 = vadd.f32 %v782, %v1618
        %v1633 = vadd.f32 %v783, %v1621
        %v1634 = vadd.f32 %v784, %v1626
        %v1635 = vadd.f32 %v785, %v1629
        %1636 = vadd.xlane.f32.xlu0 %v1632
        %v1637 = vpop.xlane.xlu0 %1636
        %1638 = vadd.xlane.f32.xlu0 %v1633
        %v1639 = vpop.xlane.xlu0 %1638
        %1640 = vadd.xlane.f32.xlu0 %v1634
        %v1641 = vpop.xlane.xlu0 %1640
        %1642 = vadd.xlane.f32.xlu0 %v1635
        %v1643 = vpop.xlane.xlu0 %1642
        %v1644 = vmul.f32 %v1637, %v796
        %v1645 = vmul.f32 %v1639, %v796
        %v1646 = vmul.f32 %v1641, %v796
        %v1647 = vmul.f32 %v1643, %v796
        %v1648 = vsub.f32 %v1632, %v1644
        %v1649 = vsub.f32 %v1633, %v1645
        %v1650 = vsub.f32 %v1634, %v1646
        %v1651 = vsub.f32 %v1635, %v1647
        %v1652 = vmul.f32 %v1648, %v1648
        %v1653 = vmul.f32 %v1649, %v1649
        %v1654 = vmul.f32 %v1650, %v1650
        %v1655 = vmul.f32 %v1651, %v1651
        %1656 = vadd.xlane.f32.xlu0 %v1652
        %v1657 = vpop.xlane.xlu0 %1656
        %1658 = vadd.xlane.f32.xlu0 %v1653
        %v1659 = vpop.xlane.xlu0 %1658
        %1660 = vadd.xlane.f32.xlu0 %v1654
        %v1661 = vpop.xlane.xlu0 %1660
        %1662 = vadd.xlane.f32.xlu0 %v1655
        %v1663 = vpop.xlane.xlu0 %1662
        %v1664 = vmul.f32 %v1657, %v796
        %v1665 = vmul.f32 %v1659, %v796
        %v1666 = vmul.f32 %v1661, %v796
        %v1667 = vmul.f32 %v1663, %v796
        %v1668 = vadd.f32 %v1664, 1e-06
        %v1669 = vadd.f32 %v1665, 1e-06
        %v1670 = vadd.f32 %v1666, 1e-06
        %v1671 = vadd.f32 %v1667, 1e-06
        %v1672 = vrsqrt.pop %v1668
        %v1673 = vrsqrt.pop %v1669
        %v1674 = vrsqrt.pop %v1670
        %v1675 = vrsqrt.pop %v1671
        %v1676 = vmul.f32 %v1648, %v1672
        %v1677 = vmul.f32 %v1649, %v1673
        %v1678 = vmul.f32 %v1650, %v1674
        %v1679 = vmul.f32 %v1651, %v1675
        %v1680 = vlaneseq
        %v1681 = vshrl.u32 %v1680, 7
        %v1682 = vsub.s32 6, %v1681
        %v1683 = vrot.slane %v786, %v1682
        %v1684 = vmul.f32 %v1676, %v1683
        %v1685 = vmul.f32 %v1677, %v1683
        %v1686 = vmul.f32 %v1678, %v1683
        %v1687 = vmul.f32 %v1679, %v1683
        %v1688 = vlaneseq
        %v1689 = vshrl.u32 %v1688, 7
        %v1690 = vsub.s32 7, %v1689
        %v1691 = vrot.slane %v786, %v1690
        %v1692 = vadd.f32 %v1684, %v1691
        %v1693 = vadd.f32 %v1685, %v1691
        %v1694 = vadd.f32 %v1686, %v1691
        %v1695 = vadd.f32 %v1687, %v1691
        %v1696 = vpack.c.bf16 %v1693, %v1692
        %v1697 = vpack.c.bf16 %v1695, %v1694
        %v1698 = vld [vmem:[%s634] sm:$0xff]
        %v1699 = vld [vmem:[%s634 + $0x8] sm:$0xff]
        %v1700 = vld [vmem:[%s634 + $0x10] sm:$0xff]
        %v1701 = vld [vmem:[%s634 + $0x18] sm:$0xff]
        %v1702 = vld [vmem:[%s634 + $0x20] sm:$0xff]
        %v1703 = vld [vmem:[%s634 + $0x28] sm:$0xff]
        %v1704 = vld [vmem:[%s634 + $0x30] sm:$0xff]
        %v1705 = vld [vmem:[%s634 + $0x38] sm:$0xff]
        %v1706 = vld [vmem:[%s634 + $0x40] sm:$0xff]
        %v1707 = vld [vmem:[%s634 + $0x48] sm:$0xff]
        %v1708 = vld [vmem:[%s634 + $0x50] sm:$0xff]
        %v1709 = vld [vmem:[%s634 + $0x58] sm:$0xff]
        %v1710 = vld [vmem:[%s634 + $0x60] sm:$0xff]
        %v1711 = vld [vmem:[%s634 + $0x68] sm:$0xff]
        %v1712 = vld [vmem:[%s634 + $0x70] sm:$0xff]
        %v1713 = vld [vmem:[%s634 + $0x78] sm:$0xff]
        %v1714 = vld [vmem:[%s634 + $0x80] sm:$0xff]
        %v1715 = vld [vmem:[%s634 + $0x88] sm:$0xff]
        %v1716 = vld [vmem:[%s634 + $0x90] sm:$0xff]
        %v1717 = vld [vmem:[%s634 + $0x98] sm:$0xff]
        %v1718 = vld [vmem:[%s634 + $0xa0] sm:$0xff]
        %v1719 = vld [vmem:[%s634 + $0xa8] sm:$0xff]
        %v1720 = vld [vmem:[%s634 + $0xb0] sm:$0xff]
        %v1721 = vld [vmem:[%s634 + $0xb8] sm:$0xff]
        %v1722 = vld [vmem:[%s634 + $0xc0] sm:$0xff]
        %v1723 = vld [vmem:[%s634 + $0xc8] sm:$0xff]
        %v1724 = vld [vmem:[%s634 + $0xd0] sm:$0xff]
        %v1725 = vld [vmem:[%s634 + $0xd8] sm:$0xff]
        %v1726 = vld [vmem:[%s634 + $0xe0] sm:$0xff]
        %v1727 = vld [vmem:[%s634 + $0xe8] sm:$0xff]
        %v1728 = vld [vmem:[%s634 + $0xf0] sm:$0xff]
        %v1729 = vld [vmem:[%s634 + $0xf8] sm:$0xff]
        %v1730 = vld [vmem:[%s540] sm:$0xf]
        %v1732 = vlaneseq
        %v1733 = vshrl.u32 %v1732, 7
        %v1734 = vsub.s32 0, %v1733
        %v1735 = vrot.slane %v1730, %v1734
        %v1736 = vlaneseq
        %v1737 = vshrl.u32 %v1736, 7
        %v1738 = vsub.s32 1, %v1737
        %v1739 = vrot.slane %v1730, %v1738
        %v1740 = vlaneseq
        %v1741 = vshrl.u32 %v1740, 7
        %v1742 = vsub.s32 2, %v1741
        %v1743 = vrot.slane %v1730, %v1742
        %v1744 = vlaneseq
        %v1745 = vshrl.u32 %v1744, 7
        %v1746 = vsub.s32 3, %v1745
        %v1747 = vrot.slane %v1730, %v1746
        %v1784 = vunpack.c.l.b16 %v1698
        %v1785 = vunpack.c.h.b16 %v1698
        %v1786 = vunpack.c.l.b16 %v1699
        %v1787 = vunpack.c.h.b16 %v1699
        %v1788 = vunpack.c.l.b16 %v1700
        %v1789 = vunpack.c.h.b16 %v1700
        %v1790 = vunpack.c.l.b16 %v1701
        %v1791 = vunpack.c.h.b16 %v1701
        %v1792 = vunpack.c.l.b16 %v1702
        %v1793 = vunpack.c.h.b16 %v1702
        %v1794 = vunpack.c.l.b16 %v1703
        %v1795 = vunpack.c.h.b16 %v1703
        %v1796 = vunpack.c.l.b16 %v1704
        %v1797 = vunpack.c.h.b16 %v1704
        %v1798 = vunpack.c.l.b16 %v1705
        %v1799 = vunpack.c.h.b16 %v1705
        %v1800 = vunpack.c.l.b16 %v1706
        %v1801 = vunpack.c.h.b16 %v1706
        %v1802 = vunpack.c.l.b16 %v1707
        %v1803 = vunpack.c.h.b16 %v1707
        %v1804 = vunpack.c.l.b16 %v1708
        %v1805 = vunpack.c.h.b16 %v1708
        %v1806 = vunpack.c.l.b16 %v1709
        %v1807 = vunpack.c.h.b16 %v1709
        %v1808 = vunpack.c.l.b16 %v1710
        %v1809 = vunpack.c.h.b16 %v1710
        %v1810 = vunpack.c.l.b16 %v1711
        %v1811 = vunpack.c.h.b16 %v1711
        %v1812 = vunpack.c.l.b16 %v1712
        %v1813 = vunpack.c.h.b16 %v1712
        %v1814 = vunpack.c.l.b16 %v1713
        %v1815 = vunpack.c.h.b16 %v1713
        %v1816 = vunpack.c.l.b16 %v1714
        %v1817 = vunpack.c.h.b16 %v1714
        %v1818 = vunpack.c.l.b16 %v1715
        %v1819 = vunpack.c.h.b16 %v1715
        %v1820 = vunpack.c.l.b16 %v1716
        %v1821 = vunpack.c.h.b16 %v1716
        %v1822 = vunpack.c.l.b16 %v1717
        %v1823 = vunpack.c.h.b16 %v1717
        %v1824 = vunpack.c.l.b16 %v1718
        %v1825 = vunpack.c.h.b16 %v1718
        %v1826 = vunpack.c.l.b16 %v1719
        %v1827 = vunpack.c.h.b16 %v1719
        %v1828 = vunpack.c.l.b16 %v1720
        %v1829 = vunpack.c.h.b16 %v1720
        %v1830 = vunpack.c.l.b16 %v1721
        %v1831 = vunpack.c.h.b16 %v1721
        %v1832 = vunpack.c.l.b16 %v1722
        %v1833 = vunpack.c.h.b16 %v1722
        %v1834 = vunpack.c.l.b16 %v1723
        %v1835 = vunpack.c.h.b16 %v1723
        %v1836 = vunpack.c.l.b16 %v1724
        %v1837 = vunpack.c.h.b16 %v1724
        %v1838 = vunpack.c.l.b16 %v1725
        %v1839 = vunpack.c.h.b16 %v1725
        %v1840 = vunpack.c.l.b16 %v1726
        %v1841 = vunpack.c.h.b16 %v1726
        %v1842 = vunpack.c.l.b16 %v1727
        %v1843 = vunpack.c.h.b16 %v1727
        %v1844 = vunpack.c.l.b16 %v1728
        %v1845 = vunpack.c.h.b16 %v1728
        %v1846 = vunpack.c.l.b16 %v1729
        %v1847 = vunpack.c.h.b16 %v1729
        %v1848 = vpack.c.b16 %v1788, %v1784
        %v1849 = vpack.c.b16 %v1789, %v1785
        %v1850 = vpack.c.b16 %v1790, %v1786
        %v1851 = vpack.c.b16 %v1791, %v1787
        %v1852 = vpack.c.b16 %v1796, %v1792
        %v1853 = vpack.c.b16 %v1797, %v1793
        %v1854 = vpack.c.b16 %v1798, %v1794
        %v1855 = vpack.c.b16 %v1799, %v1795
        %v1856 = vpack.c.b16 %v1804, %v1800
        %v1857 = vpack.c.b16 %v1805, %v1801
        %v1858 = vpack.c.b16 %v1806, %v1802
        %v1859 = vpack.c.b16 %v1807, %v1803
        %v1860 = vpack.c.b16 %v1812, %v1808
        %v1861 = vpack.c.b16 %v1813, %v1809
        %v1862 = vpack.c.b16 %v1814, %v1810
        %v1863 = vpack.c.b16 %v1815, %v1811
        %v1864 = vpack.c.b16 %v1820, %v1816
        %v1865 = vpack.c.b16 %v1821, %v1817
        %v1866 = vpack.c.b16 %v1822, %v1818
        %v1867 = vpack.c.b16 %v1823, %v1819
        %v1868 = vpack.c.b16 %v1828, %v1824
        %v1869 = vpack.c.b16 %v1829, %v1825
        %v1870 = vpack.c.b16 %v1830, %v1826
        %v1871 = vpack.c.b16 %v1831, %v1827
        %v1872 = vpack.c.b16 %v1836, %v1832
        %v1873 = vpack.c.b16 %v1837, %v1833
        %v1874 = vpack.c.b16 %v1838, %v1834
        %v1875 = vpack.c.b16 %v1839, %v1835
        %v1876 = vpack.c.b16 %v1844, %v1840
        %v1877 = vpack.c.b16 %v1845, %v1841
        %v1878 = vpack.c.b16 %v1846, %v1842
        %v1879 = vpack.c.b16 %v1847, %v1843
        %1912 = vmatprep.subr.bf16.mxu0 %v1877
        %1913 = vmatpush1.bf16.msra.mxu0 %v1876
        %1914 = vmatprep.subr.bf16.mxu0 %v1873
        %1915 = vmatpush1.bf16.msra.mxu0 %v1872
        %1916 = vmatprep.subr.bf16.mxu0 %v1869
        %1917 = vmatpush1.bf16.msra.mxu0 %v1868
        %1918 = vmatprep.subr.bf16.mxu0 %v1865
        %1919 = vmatpush1.bf16.msra.mxu0 %v1864
        %1920 = vmatprep.subr.bf16.mxu0 %v1861
        %1921 = vmatpush1.bf16.msra.mxu0 %v1860
        %1922 = vmatprep.subr.bf16.mxu0 %v1857
        %1923 = vmatpush1.bf16.msra.mxu0 %v1856
        %1924 = vmatprep.subr.bf16.mxu0 %v1853
        %1925 = vmatpush1.bf16.msra.mxu0 %v1852
        %1926 = vmatprep.subr.bf16.mxu0 %v1849
        %1927 = vmatpush1.bf16.msra.mxu0 %v1848
        %1928 = vmatprep.subr.bf16.mxu0 0
        %1929 = vmatpush2.bf16.msra.mxu0 0
        %1930 = vmatprep.subr.bf16.mxu0 0
        %1931 = vmatpush2.bf16.msra.mxu0 0
        %1932 = vmatprep.subr.bf16.mxu0 0
        %1933 = vmatpush2.bf16.msra.mxu0 0
        %1934 = vmatprep.subr.bf16.mxu0 0
        %1935 = vmatpush2.bf16.msra.mxu0 0
        %1936 = vmatprep.subr.bf16.mxu0 0
        %1937 = vmatpush2.bf16.msra.mxu0 0
        %1938 = vmatprep.subr.bf16.mxu0 0
        %1939 = vmatpush2.bf16.msra.mxu0 0
        %1940 = vmatprep.subr.bf16.mxu0 0
        %1941 = vmatpush2.bf16.msra.mxu0 0
        %1942 = vmatprep.subr.bf16.mxu0 0
        %1943 = vmatpush2.bf16.msra.mxu0 0
        %1944 = vmatprep.mubr.bf16.mxu0 0
        %1945 = vmatmul.mubr.bf16.gmra.mxu0 %v1696
        %v1946 = vpop.f32.mrf.mxu0
        %v1947 = vadd.f32 %v1735, %v1946
        %v1948 = vpop.f32.mrf.mxu0
        %v1949 = vadd.f32 %v1739, %v1948
        %v1950 = vpop.f32.mrf.mxu0
        %v1951 = vadd.f32 %v1735, %v1950
        %v1952 = vpop.f32.mrf.mxu0
        %v1953 = vadd.f32 %v1739, %v1952
        %1954 = vmatprep.mubr.bf16.mxu0 0
        %1955 = vmatmul.mubr.bf16.gmra.mxu0 %v1697
        %v1956 = vpop.f32.mrf.mxu0
        %v1957 = vadd.f32 %v1735, %v1956
        %v1958 = vpop.f32.mrf.mxu0
        %v1959 = vadd.f32 %v1739, %v1958
        %v1960 = vpop.f32.mrf.mxu0
        %v1961 = vadd.f32 %v1735, %v1960
        %v1962 = vpop.f32.mrf.mxu0
        %v1963 = vadd.f32 %v1739, %v1962
        %1964 = vdwg.mxu0
        %1965 = vmatprep.subr.bf16.mxu0 %v1879
        %1966 = vmatpush1.bf16.msra.mxu0 %v1878
        %1967 = vmatprep.subr.bf16.mxu0 %v1875
        %1968 = vmatpush1.bf16.msra.mxu0 %v1874
        %1969 = vmatprep.subr.bf16.mxu0 %v1871
        %1970 = vmatpush1.bf16.msra.mxu0 %v1870
        %1971 = vmatprep.subr.bf16.mxu0 %v1867
        %1972 = vmatpush1.bf16.msra.mxu0 %v1866
        %1973 = vmatprep.subr.bf16.mxu0 %v1863
        %1974 = vmatpush1.bf16.msra.mxu0 %v1862
        %1975 = vmatprep.subr.bf16.mxu0 %v1859
        %1976 = vmatpush1.bf16.msra.mxu0 %v1858
        %1977 = vmatprep.subr.bf16.mxu0 %v1855
        %1978 = vmatpush1.bf16.msra.mxu0 %v1854
        %1979 = vmatprep.subr.bf16.mxu0 %v1851
        %1980 = vmatpush1.bf16.msra.mxu0 %v1850
        %1981 = vmatprep.subr.bf16.mxu0 0
        %1982 = vmatpush2.bf16.msra.mxu0 0
        %1983 = vmatprep.subr.bf16.mxu0 0
        %1984 = vmatpush2.bf16.msra.mxu0 0
        %1985 = vmatprep.subr.bf16.mxu0 0
        %1986 = vmatpush2.bf16.msra.mxu0 0
        %1987 = vmatprep.subr.bf16.mxu0 0
        %1988 = vmatpush2.bf16.msra.mxu0 0
        %1989 = vmatprep.subr.bf16.mxu0 0
        %1990 = vmatpush2.bf16.msra.mxu0 0
        %1991 = vmatprep.subr.bf16.mxu0 0
        %1992 = vmatpush2.bf16.msra.mxu0 0
        %1993 = vmatprep.subr.bf16.mxu0 0
        %1994 = vmatpush2.bf16.msra.mxu0 0
        %1995 = vmatprep.subr.bf16.mxu0 0
        %1996 = vmatpush2.bf16.msra.mxu0 0
        %1997 = vmatprep.mubr.bf16.mxu0 0
        %1998 = vmatmul.mubr.bf16.gmra.mxu0 %v1696
        %v1999 = vpop.f32.mrf.mxu0
        %v2000 = vadd.f32 %v1743, %v1999
        %v2001 = vpop.f32.mrf.mxu0
        %v2002 = vadd.f32 %v1747, %v2001
        %v2003 = vpop.f32.mrf.mxu0
        %v2004 = vadd.f32 %v1743, %v2003
        %v2005 = vpop.f32.mrf.mxu0
        %v2006 = vadd.f32 %v1747, %v2005
        %2007 = vmatprep.mubr.bf16.mxu0 0
        %2008 = vmatmul.mubr.bf16.gmra.mxu0 %v1697
        %v2009 = vpop.f32.mrf.mxu0
        %v2010 = vadd.f32 %v1743, %v2009
        %v2011 = vpop.f32.mrf.mxu0
        %v2012 = vadd.f32 %v1747, %v2011
        %v2013 = vpop.f32.mrf.mxu0
        %v2014 = vadd.f32 %v1743, %v2013
        %v2015 = vpop.f32.mrf.mxu0
        %v2016 = vadd.f32 %v1747, %v2015
        %2017 = vdwg.mxu0
        %v2018 = vmul.f32 %v1947, 0.5
        %v2019 = vmul.f32 %v1949, 0.5
        %v2020 = vmul.f32 %v2000, 0.5
        %v2021 = vmul.f32 %v2002, 0.5
        %v2022 = vmul.f32 %v1951, 0.5
        %v2023 = vmul.f32 %v1953, 0.5
        %v2024 = vmul.f32 %v2004, 0.5
        %v2025 = vmul.f32 %v2006, 0.5
        %v2026 = vmul.f32 %v1957, 0.5
        %v2027 = vmul.f32 %v1959, 0.5
        %v2028 = vmul.f32 %v2010, 0.5
        %v2029 = vmul.f32 %v2012, 0.5
        %v2030 = vmul.f32 %v1961, 0.5
        %v2031 = vmul.f32 %v1963, 0.5
        %v2032 = vmul.f32 %v2014, 0.5
        %v2033 = vmul.f32 %v2016, 0.5
        %v2034 = vmul.f32 %v1947, 0.044715
        %v2035 = vmul.f32 %v1949, 0.044715
        %v2036 = vmul.f32 %v2000, 0.044715
        %v2037 = vmul.f32 %v2002, 0.044715
        %v2038 = vmul.f32 %v1951, 0.044715
        %v2039 = vmul.f32 %v1953, 0.044715
        %v2040 = vmul.f32 %v2004, 0.044715
        %v2041 = vmul.f32 %v2006, 0.044715
        %v2042 = vmul.f32 %v1957, 0.044715
        %v2043 = vmul.f32 %v1959, 0.044715
        %v2044 = vmul.f32 %v2010, 0.044715
        %v2045 = vmul.f32 %v2012, 0.044715
        %v2046 = vmul.f32 %v1961, 0.044715
        %v2047 = vmul.f32 %v1963, 0.044715
        %v2048 = vmul.f32 %v2014, 0.044715
        %v2049 = vmul.f32 %v2016, 0.044715
        %v2050 = vmul.f32 %v2034, %v1947
        %v2051 = vmul.f32 %v2035, %v1949
        %v2052 = vmul.f32 %v2036, %v2000
        %v2053 = vmul.f32 %v2037, %v2002
        %v2054 = vmul.f32 %v2038, %v1951
        %v2055 = vmul.f32 %v2039, %v1953
        %v2056 = vmul.f32 %v2040, %v2004
        %v2057 = vmul.f32 %v2041, %v2006
        %v2058 = vmul.f32 %v2042, %v1957
        %v2059 = vmul.f32 %v2043, %v1959
        %v2060 = vmul.f32 %v2044, %v2010
        %v2061 = vmul.f32 %v2045, %v2012
        %v2062 = vmul.f32 %v2046, %v1961
        %v2063 = vmul.f32 %v2047, %v1963
        %v2064 = vmul.f32 %v2048, %v2014
        %v2065 = vmul.f32 %v2049, %v2016
        %v2066 = vmul.f32 %v2050, %v1947
        %v2067 = vmul.f32 %v2051, %v1949
        %v2068 = vmul.f32 %v2052, %v2000
        %v2069 = vmul.f32 %v2053, %v2002
        %v2070 = vmul.f32 %v2054, %v1951
        %v2071 = vmul.f32 %v2055, %v1953
        %v2072 = vmul.f32 %v2056, %v2004
        %v2073 = vmul.f32 %v2057, %v2006
        %v2074 = vmul.f32 %v2058, %v1957
        %v2075 = vmul.f32 %v2059, %v1959
        %v2076 = vmul.f32 %v2060, %v2010
        %v2077 = vmul.f32 %v2061, %v2012
        %v2078 = vmul.f32 %v2062, %v1961
        %v2079 = vmul.f32 %v2063, %v1963
        %v2080 = vmul.f32 %v2064, %v2014
        %v2081 = vmul.f32 %v2065, %v2016
        %v2082 = vadd.f32 %v1947, %v2066
        %v2083 = vadd.f32 %v1949, %v2067
        %v2084 = vadd.f32 %v2000, %v2068
        %v2085 = vadd.f32 %v2002, %v2069
        %v2086 = vadd.f32 %v1951, %v2070
        %v2087 = vadd.f32 %v1953, %v2071
        %v2088 = vadd.f32 %v2004, %v2072
        %v2089 = vadd.f32 %v2006, %v2073
        %v2090 = vadd.f32 %v1957, %v2074
        %v2091 = vadd.f32 %v1959, %v2075
        %v2092 = vadd.f32 %v2010, %v2076
        %v2093 = vadd.f32 %v2012, %v2077
        %v2094 = vadd.f32 %v1961, %v2078
        %v2095 = vadd.f32 %v1963, %v2079
        %v2096 = vadd.f32 %v2014, %v2080
        %v2097 = vadd.f32 %v2016, %v2081
        %v2098 = vmul.f32 %v2082, 0.7978846
        %v2099 = vmul.f32 %v2083, 0.7978846
        %v2100 = vmul.f32 %v2084, 0.7978846
        %v2101 = vmul.f32 %v2085, 0.7978846
        %v2102 = vmul.f32 %v2086, 0.7978846
        %v2103 = vmul.f32 %v2087, 0.7978846
        %v2104 = vmul.f32 %v2088, 0.7978846
        %v2105 = vmul.f32 %v2089, 0.7978846
        %v2106 = vmul.f32 %v2090, 0.7978846
        %v2107 = vmul.f32 %v2091, 0.7978846
        %v2108 = vmul.f32 %v2092, 0.7978846
        %v2109 = vmul.f32 %v2093, 0.7978846
        %v2110 = vmul.f32 %v2094, 0.7978846
        %v2111 = vmul.f32 %v2095, 0.7978846
        %v2112 = vmul.f32 %v2096, 0.7978846
        %v2113 = vmul.f32 %v2097, 0.7978846
        %v2114 = vtanh.pop %v2098
        %v2115 = vtanh.pop %v2099
        %v2116 = vtanh.pop %v2100
        %v2117 = vtanh.pop %v2101
        %v2118 = vtanh.pop %v2102
        %v2119 = vtanh.pop %v2103
        %v2120 = vtanh.pop %v2104
        %v2121 = vtanh.pop %v2105
        %v2122 = vtanh.pop %v2106
        %v2123 = vtanh.pop %v2107
        %v2124 = vtanh.pop %v2108
        %v2125 = vtanh.pop %v2109
        %v2126 = vtanh.pop %v2110
        %v2127 = vtanh.pop %v2111
        %v2128 = vtanh.pop %v2112
        %v2129 = vtanh.pop %v2113
        %v2130 = vadd.f32 %v2114, 1.0
        %v2131 = vadd.f32 %v2115, 1.0
        %v2132 = vadd.f32 %v2116, 1.0
        %v2133 = vadd.f32 %v2117, 1.0
        %v2134 = vadd.f32 %v2118, 1.0
        %v2135 = vadd.f32 %v2119, 1.0
        %v2136 = vadd.f32 %v2120, 1.0
        %v2137 = vadd.f32 %v2121, 1.0
        %v2138 = vadd.f32 %v2122, 1.0
        %v2139 = vadd.f32 %v2123, 1.0
        %v2140 = vadd.f32 %v2124, 1.0
        %v2141 = vadd.f32 %v2125, 1.0
        %v2142 = vadd.f32 %v2126, 1.0
        %v2143 = vadd.f32 %v2127, 1.0
        %v2144 = vadd.f32 %v2128, 1.0
        %v2145 = vadd.f32 %v2129, 1.0
        %v2146 = vmul.f32 %v2018, %v2130
        %v2147 = vmul.f32 %v2019, %v2131
        %v2148 = vmul.f32 %v2020, %v2132
        %v2149 = vmul.f32 %v2021, %v2133
        %v2150 = vmul.f32 %v2022, %v2134
        %v2151 = vmul.f32 %v2023, %v2135
        %v2152 = vmul.f32 %v2024, %v2136
        %v2153 = vmul.f32 %v2025, %v2137
        %v2154 = vmul.f32 %v2026, %v2138
        %v2155 = vmul.f32 %v2027, %v2139
        %v2156 = vmul.f32 %v2028, %v2140
        %v2157 = vmul.f32 %v2029, %v2141
        %v2158 = vmul.f32 %v2030, %v2142
        %v2159 = vmul.f32 %v2031, %v2143
        %v2160 = vmul.f32 %v2032, %v2144
        %v2161 = vmul.f32 %v2033, %v2145
        %v2162 = vpack.c.bf16 %v2150, %v2146
        %v2163 = vpack.c.bf16 %v2151, %v2147
        %v2164 = vpack.c.bf16 %v2152, %v2148
        %v2165 = vpack.c.bf16 %v2153, %v2149
        %v2166 = vpack.c.bf16 %v2158, %v2154
        %v2167 = vpack.c.bf16 %v2159, %v2155
        %v2168 = vpack.c.bf16 %v2160, %v2156
        %v2169 = vpack.c.bf16 %v2161, %v2157
        %v2170 = vld [vmem:[%s639] sm:$0xf]
        %v2171 = vld [vmem:[%s639 + $0x4] sm:$0xf]
        %v2172 = vld [vmem:[%s639 + $0x8] sm:$0xf]
        %v2173 = vld [vmem:[%s639 + $0xc] sm:$0xf]
        %v2174 = vld [vmem:[%s639 + $0x10] sm:$0xf]
        %v2175 = vld [vmem:[%s639 + $0x14] sm:$0xf]
        %v2176 = vld [vmem:[%s639 + $0x18] sm:$0xf]
        %v2177 = vld [vmem:[%s639 + $0x1c] sm:$0xf]
        %v2178 = vld [vmem:[%s639 + $0x20] sm:$0xf]
        %v2179 = vld [vmem:[%s639 + $0x24] sm:$0xf]
        %v2180 = vld [vmem:[%s639 + $0x28] sm:$0xf]
        %v2181 = vld [vmem:[%s639 + $0x2c] sm:$0xf]
        %v2182 = vld [vmem:[%s639 + $0x30] sm:$0xf]
        %v2183 = vld [vmem:[%s639 + $0x34] sm:$0xf]
        %v2184 = vld [vmem:[%s639 + $0x38] sm:$0xf]
        %v2185 = vld [vmem:[%s639 + $0x3c] sm:$0xf]
        %v2186 = vld [vmem:[%s639 + $0x40] sm:$0xf]
        %v2187 = vld [vmem:[%s639 + $0x44] sm:$0xf]
        %v2188 = vld [vmem:[%s639 + $0x48] sm:$0xf]
        %v2189 = vld [vmem:[%s639 + $0x4c] sm:$0xf]
        %v2190 = vld [vmem:[%s639 + $0x50] sm:$0xf]
        %v2191 = vld [vmem:[%s639 + $0x54] sm:$0xf]
        %v2192 = vld [vmem:[%s639 + $0x58] sm:$0xf]
        %v2193 = vld [vmem:[%s639 + $0x5c] sm:$0xf]
        %v2194 = vld [vmem:[%s639 + $0x60] sm:$0xf]
        %v2195 = vld [vmem:[%s639 + $0x64] sm:$0xf]
        %v2196 = vld [vmem:[%s639 + $0x68] sm:$0xf]
        %v2197 = vld [vmem:[%s639 + $0x6c] sm:$0xf]
        %v2198 = vld [vmem:[%s639 + $0x70] sm:$0xf]
        %v2199 = vld [vmem:[%s639 + $0x74] sm:$0xf]
        %v2200 = vld [vmem:[%s639 + $0x78] sm:$0xf]
        %v2201 = vld [vmem:[%s639 + $0x7c] sm:$0xf]
        %v2202 = vld [vmem:[%s639 + $0x80] sm:$0xf]
        %v2203 = vld [vmem:[%s639 + $0x84] sm:$0xf]
        %v2204 = vld [vmem:[%s639 + $0x88] sm:$0xf]
        %v2205 = vld [vmem:[%s639 + $0x8c] sm:$0xf]
        %v2206 = vld [vmem:[%s639 + $0x90] sm:$0xf]
        %v2207 = vld [vmem:[%s639 + $0x94] sm:$0xf]
        %v2208 = vld [vmem:[%s639 + $0x98] sm:$0xf]
        %v2209 = vld [vmem:[%s639 + $0x9c] sm:$0xf]
        %v2210 = vld [vmem:[%s639 + $0xa0] sm:$0xf]
        %v2211 = vld [vmem:[%s639 + $0xa4] sm:$0xf]
        %v2212 = vld [vmem:[%s639 + $0xa8] sm:$0xf]
        %v2213 = vld [vmem:[%s639 + $0xac] sm:$0xf]
        %v2214 = vld [vmem:[%s639 + $0xb0] sm:$0xf]
        %v2215 = vld [vmem:[%s639 + $0xb4] sm:$0xf]
        %v2216 = vld [vmem:[%s639 + $0xb8] sm:$0xf]
        %v2217 = vld [vmem:[%s639 + $0xbc] sm:$0xf]
        %v2218 = vld [vmem:[%s639 + $0xc0] sm:$0xf]
        %v2219 = vld [vmem:[%s639 + $0xc4] sm:$0xf]
        %v2220 = vld [vmem:[%s639 + $0xc8] sm:$0xf]
        %v2221 = vld [vmem:[%s639 + $0xcc] sm:$0xf]
        %v2222 = vld [vmem:[%s639 + $0xd0] sm:$0xf]
        %v2223 = vld [vmem:[%s639 + $0xd4] sm:$0xf]
        %v2224 = vld [vmem:[%s639 + $0xd8] sm:$0xf]
        %v2225 = vld [vmem:[%s639 + $0xdc] sm:$0xf]
        %v2226 = vld [vmem:[%s639 + $0xe0] sm:$0xf]
        %v2227 = vld [vmem:[%s639 + $0xe4] sm:$0xf]
        %v2228 = vld [vmem:[%s639 + $0xe8] sm:$0xf]
        %v2229 = vld [vmem:[%s639 + $0xec] sm:$0xf]
        %v2230 = vld [vmem:[%s639 + $0xf0] sm:$0xf]
        %v2231 = vld [vmem:[%s639 + $0xf4] sm:$0xf]
        %v2232 = vld [vmem:[%s639 + $0xf8] sm:$0xf]
        %v2233 = vld [vmem:[%s639 + $0xfc] sm:$0xf]
        %v2234 = vlaneseq
        %v2235 = vshrl.u32 %v2234, 7
        %v2236 = vsub.s32 0, %v2235
        %v2237 = vrot.slane %v787, %v2236
        %v2302 = vunpack.c.l.b16 %v2170
        %v2303 = vunpack.c.l.b16 %v2171
        %v2304 = vunpack.c.l.b16 %v2172
        %v2305 = vunpack.c.l.b16 %v2173
        %v2306 = vunpack.c.l.b16 %v2174
        %v2307 = vunpack.c.l.b16 %v2175
        %v2308 = vunpack.c.l.b16 %v2176
        %v2309 = vunpack.c.l.b16 %v2177
        %v2310 = vunpack.c.l.b16 %v2178
        %v2311 = vunpack.c.l.b16 %v2179
        %v2312 = vunpack.c.l.b16 %v2180
        %v2313 = vunpack.c.l.b16 %v2181
        %v2314 = vunpack.c.l.b16 %v2182
        %v2315 = vunpack.c.l.b16 %v2183
        %v2316 = vunpack.c.l.b16 %v2184
        %v2317 = vunpack.c.l.b16 %v2185
        %v2318 = vunpack.c.l.b16 %v2186
        %v2319 = vunpack.c.l.b16 %v2187
        %v2320 = vunpack.c.l.b16 %v2188
        %v2321 = vunpack.c.l.b16 %v2189
        %v2322 = vunpack.c.l.b16 %v2190
        %v2323 = vunpack.c.l.b16 %v2191
        %v2324 = vunpack.c.l.b16 %v2192
        %v2325 = vunpack.c.l.b16 %v2193
        %v2326 = vunpack.c.l.b16 %v2194
        %v2327 = vunpack.c.l.b16 %v2195
        %v2328 = vunpack.c.l.b16 %v2196
        %v2329 = vunpack.c.l.b16 %v2197
        %v2330 = vunpack.c.l.b16 %v2198
        %v2331 = vunpack.c.l.b16 %v2199
        %v2332 = vunpack.c.l.b16 %v2200
        %v2333 = vunpack.c.l.b16 %v2201
        %v2334 = vunpack.c.l.b16 %v2202
        %v2335 = vunpack.c.l.b16 %v2203
        %v2336 = vunpack.c.l.b16 %v2204
        %v2337 = vunpack.c.l.b16 %v2205
        %v2338 = vunpack.c.l.b16 %v2206
        %v2339 = vunpack.c.l.b16 %v2207
        %v2340 = vunpack.c.l.b16 %v2208
        %v2341 = vunpack.c.l.b16 %v2209
        %v2342 = vunpack.c.l.b16 %v2210
        %v2343 = vunpack.c.l.b16 %v2211
        %v2344 = vunpack.c.l.b16 %v2212
        %v2345 = vunpack.c.l.b16 %v2213
        %v2346 = vunpack.c.l.b16 %v2214
        %v2347 = vunpack.c.l.b16 %v2215
        %v2348 = vunpack.c.l.b16 %v2216
        %v2349 = vunpack.c.l.b16 %v2217
        %v2350 = vunpack.c.l.b16 %v2218
        %v2351 = vunpack.c.l.b16 %v2219
        %v2352 = vunpack.c.l.b16 %v2220
        %v2353 = vunpack.c.l.b16 %v2221
        %v2354 = vunpack.c.l.b16 %v2222
        %v2355 = vunpack.c.l.b16 %v2223
        %v2356 = vunpack.c.l.b16 %v2224
        %v2357 = vunpack.c.l.b16 %v2225
        %v2358 = vunpack.c.l.b16 %v2226
        %v2359 = vunpack.c.l.b16 %v2227
        %v2360 = vunpack.c.l.b16 %v2228
        %v2361 = vunpack.c.l.b16 %v2229
        %v2362 = vunpack.c.l.b16 %v2230
        %v2363 = vunpack.c.l.b16 %v2231
        %v2364 = vunpack.c.l.b16 %v2232
        %v2365 = vunpack.c.l.b16 %v2233
        %v2366 = vpack.c.b16 %v2303, %v2302
        %v2367 = vpack.c.b16 %v2305, %v2304
        %v2368 = vpack.c.b16 %v2307, %v2306
        %v2369 = vpack.c.b16 %v2309, %v2308
        %v2370 = vpack.c.b16 %v2311, %v2310
        %v2371 = vpack.c.b16 %v2313, %v2312
        %v2372 = vpack.c.b16 %v2315, %v2314
        %v2373 = vpack.c.b16 %v2317, %v2316
        %v2374 = vpack.c.b16 %v2319, %v2318
        %v2375 = vpack.c.b16 %v2321, %v2320
        %v2376 = vpack.c.b16 %v2323, %v2322
        %v2377 = vpack.c.b16 %v2325, %v2324
        %v2378 = vpack.c.b16 %v2327, %v2326
        %v2379 = vpack.c.b16 %v2329, %v2328
        %v2380 = vpack.c.b16 %v2331, %v2330
        %v2381 = vpack.c.b16 %v2333, %v2332
        %v2382 = vpack.c.b16 %v2335, %v2334
        %v2383 = vpack.c.b16 %v2337, %v2336
        %v2384 = vpack.c.b16 %v2339, %v2338
        %v2385 = vpack.c.b16 %v2341, %v2340
        %v2386 = vpack.c.b16 %v2343, %v2342
        %v2387 = vpack.c.b16 %v2345, %v2344
        %v2388 = vpack.c.b16 %v2347, %v2346
        %v2389 = vpack.c.b16 %v2349, %v2348
        %v2390 = vpack.c.b16 %v2351, %v2350
        %v2391 = vpack.c.b16 %v2353, %v2352
        %v2392 = vpack.c.b16 %v2355, %v2354
        %v2393 = vpack.c.b16 %v2357, %v2356
        %v2394 = vpack.c.b16 %v2359, %v2358
        %v2395 = vpack.c.b16 %v2361, %v2360
        %v2396 = vpack.c.b16 %v2363, %v2362
        %v2397 = vpack.c.b16 %v2365, %v2364
        %2430 = vmatprep.subr.bf16.mxu0 0
        %2431 = vmatpush1.bf16.msra.mxu0 %v2373
        %2432 = vmatprep.subr.bf16.mxu0 0
        %2433 = vmatpush1.bf16.msra.mxu0 %v2372
        %2434 = vmatprep.subr.bf16.mxu0 0
        %2435 = vmatpush1.bf16.msra.mxu0 %v2371
        %2436 = vmatprep.subr.bf16.mxu0 0
        %2437 = vmatpush1.bf16.msra.mxu0 %v2370
        %2438 = vmatprep.subr.bf16.mxu0 0
        %2439 = vmatpush1.bf16.msra.mxu0 %v2369
        %2440 = vmatprep.subr.bf16.mxu0 0
        %2441 = vmatpush1.bf16.msra.mxu0 %v2368
        %2442 = vmatprep.subr.bf16.mxu0 0
        %2443 = vmatpush1.bf16.msra.mxu0 %v2367
        %2444 = vmatprep.subr.bf16.mxu0 0
        %2445 = vmatpush1.bf16.msra.mxu0 %v2366
        %2446 = vmatprep.subr.bf16.mxu0 0
        %2447 = vmatpush2.bf16.msra.mxu0 %v2381
        %2448 = vmatprep.subr.bf16.mxu0 0
        %2449 = vmatpush2.bf16.msra.mxu0 %v2380
        %2450 = vmatprep.subr.bf16.mxu0 0
        %2451 = vmatpush2.bf16.msra.mxu0 %v2379
        %2452 = vmatprep.subr.bf16.mxu0 0
        %2453 = vmatpush2.bf16.msra.mxu0 %v2378
        %2454 = vmatprep.subr.bf16.mxu0 0
        %2455 = vmatpush2.bf16.msra.mxu0 %v2377
        %2456 = vmatprep.subr.bf16.mxu0 0
        %2457 = vmatpush2.bf16.msra.mxu0 %v2376
        %2458 = vmatprep.subr.bf16.mxu0 0
        %2459 = vmatpush2.bf16.msra.mxu0 %v2375
        %2460 = vmatprep.subr.bf16.mxu0 0
        %2461 = vmatpush2.bf16.msra.mxu0 %v2374
        %2462 = vmatprep.mubr.bf16.mxu0 %v2163
        %2463 = vmatmul.mubr.bf16.gmra.mxu0 %v2162
        %v2464 = vpop.f32.mrf.mxu0
        %v2465 = vadd.f32 %v2237, %v2464
        %v2466 = vpop.f32.mrf.mxu0
        %v2467 = vpop.f32.mrf.mxu0
        %v2468 = vadd.f32 %v2237, %v2467
        %v2469 = vpop.f32.mrf.mxu0
        %2470 = vmatprep.mubr.bf16.mxu0 %v2167
        %2471 = vmatmul.mubr.bf16.gmra.mxu0 %v2166
        %v2472 = vpop.f32.mrf.mxu0
        %v2473 = vadd.f32 %v2237, %v2472
        %v2474 = vpop.f32.mrf.mxu0
        %v2475 = vpop.f32.mrf.mxu0
        %v2476 = vadd.f32 %v2237, %v2475
        %v2477 = vpop.f32.mrf.mxu0
        %2478 = vdwg.mxu0
        %2479 = vmatprep.subr.bf16.mxu0 0
        %2480 = vmatpush1.bf16.msra.mxu0 %v2389
        %2481 = vmatprep.subr.bf16.mxu0 0
        %2482 = vmatpush1.bf16.msra.mxu0 %v2388
        %2483 = vmatprep.subr.bf16.mxu0 0
        %2484 = vmatpush1.bf16.msra.mxu0 %v2387
        %2485 = vmatprep.subr.bf16.mxu0 0
        %2486 = vmatpush1.bf16.msra.mxu0 %v2386
        %2487 = vmatprep.subr.bf16.mxu0 0
        %2488 = vmatpush1.bf16.msra.mxu0 %v2385
        %2489 = vmatprep.subr.bf16.mxu0 0
        %2490 = vmatpush1.bf16.msra.mxu0 %v2384
        %2491 = vmatprep.subr.bf16.mxu0 0
        %2492 = vmatpush1.bf16.msra.mxu0 %v2383
        %2493 = vmatprep.subr.bf16.mxu0 0
        %2494 = vmatpush1.bf16.msra.mxu0 %v2382
        %2495 = vmatprep.subr.bf16.mxu0 0
        %2496 = vmatpush2.bf16.msra.mxu0 %v2397
        %2497 = vmatprep.subr.bf16.mxu0 0
        %2498 = vmatpush2.bf16.msra.mxu0 %v2396
        %2499 = vmatprep.subr.bf16.mxu0 0
        %2500 = vmatpush2.bf16.msra.mxu0 %v2395
        %2501 = vmatprep.subr.bf16.mxu0 0
        %2502 = vmatpush2.bf16.msra.mxu0 %v2394
        %2503 = vmatprep.subr.bf16.mxu0 0
        %2504 = vmatpush2.bf16.msra.mxu0 %v2393
        %2505 = vmatprep.subr.bf16.mxu0 0
        %2506 = vmatpush2.bf16.msra.mxu0 %v2392
        %2507 = vmatprep.subr.bf16.mxu0 0
        %2508 = vmatpush2.bf16.msra.mxu0 %v2391
        %2509 = vmatprep.subr.bf16.mxu0 0
        %2510 = vmatpush2.bf16.msra.mxu0 %v2390
        %2511 = vmatprep.mubr.bf16.mxu0 %v2165
        %2512 = vmatmul.mubr.bf16.gmra.mxu0 %v2164
        %v2513 = vpop.f32.mrf.mxu0
        %v2514 = vadd.f32 %v2465, %v2513
        %v2515 = vpop.f32.mrf.mxu0
        %v2516 = vpop.f32.mrf.mxu0
        %v2517 = vadd.f32 %v2468, %v2516
        %v2518 = vpop.f32.mrf.mxu0
        %2519 = vmatprep.mubr.bf16.mxu0 %v2169
        %2520 = vmatmul.mubr.bf16.gmra.mxu0 %v2168
        %v2521 = vpop.f32.mrf.mxu0
        %v2522 = vadd.f32 %v2473, %v2521
        %v2523 = vpop.f32.mrf.mxu0
        %v2524 = vpop.f32.mrf.mxu0
        %v2525 = vadd.f32 %v2476, %v2524
        %v2526 = vpop.f32.mrf.mxu0
        %2527 = vdwg.mxu0
        %v2528 = vadd.f32 %v1632, %v2514
        %v2529 = vadd.f32 %v1633, %v2517
        %v2530 = vadd.f32 %v1634, %v2522
        %v2531 = vadd.f32 %v1635, %v2525
        %2532 = vst [vmem:[#allocation2] sm:$0xff] %v2528
        %2533 = vst [vmem:[#allocation2 + $0x8] sm:$0xff] %v2529
        %2534 = vst [vmem:[#allocation2 + $0x10] sm:$0xff] %v2530
        %2535 = vst [vmem:[#allocation2 + $0x18] sm:$0xff] %v2531
        %v2536 = vld [vmem:[#allocation10] sm:$0x3]
        %2537 = vadd.xlane.f32.xlu0 %v2528
        %v2538 = vpop.xlane.xlu0 %2537
        %2539 = vadd.xlane.f32.xlu0 %v2529
        %v2540 = vpop.xlane.xlu0 %2539
        %2541 = vadd.xlane.f32.xlu0 %v2530
        %v2542 = vpop.xlane.xlu0 %2541
        %2543 = vadd.xlane.f32.xlu0 %v2531
        %v2544 = vpop.xlane.xlu0 %2543
        %v2545 = vmul.f32 %v2538, %v796
        %v2546 = vmul.f32 %v2540, %v796
        %v2547 = vmul.f32 %v2542, %v796
        %v2548 = vmul.f32 %v2544, %v796
        %v2549 = vsub.f32 %v2528, %v2545
        %v2550 = vsub.f32 %v2529, %v2546
        %v2551 = vsub.f32 %v2530, %v2547
        %v2552 = vsub.f32 %v2531, %v2548
        %v2553 = vmul.f32 %v2549, %v2549
        %v2554 = vmul.f32 %v2550, %v2550
        %v2555 = vmul.f32 %v2551, %v2551
        %v2556 = vmul.f32 %v2552, %v2552
        %2557 = vadd.xlane.f32.xlu0 %v2553
        %v2558 = vpop.xlane.xlu0 %2557
        %2559 = vadd.xlane.f32.xlu0 %v2554
        %v2560 = vpop.xlane.xlu0 %2559
        %2561 = vadd.xlane.f32.xlu0 %v2555
        %v2562 = vpop.xlane.xlu0 %2561
        %2563 = vadd.xlane.f32.xlu0 %v2556
        %v2564 = vpop.xlane.xlu0 %2563
        %v2565 = vmul.f32 %v2558, %v796
        %v2566 = vmul.f32 %v2560, %v796
        %v2567 = vmul.f32 %v2562, %v796
        %v2568 = vmul.f32 %v2564, %v796
        %v2569 = vadd.f32 %v2565, 1e-06
        %v2570 = vadd.f32 %v2566, 1e-06
        %v2571 = vadd.f32 %v2567, 1e-06
        %v2572 = vadd.f32 %v2568, 1e-06
        %v2573 = vrsqrt.pop %v2569
        %v2574 = vrsqrt.pop %v2570
        %v2575 = vrsqrt.pop %v2571
        %v2576 = vrsqrt.pop %v2572
        %v2577 = vmul.f32 %v2549, %v2573
        %v2578 = vmul.f32 %v2550, %v2574
        %v2579 = vmul.f32 %v2551, %v2575
        %v2580 = vmul.f32 %v2552, %v2576
        %v2581 = vlaneseq
        %v2582 = vshrl.u32 %v2581, 7
        %v2583 = vsub.s32 0, %v2582
        %v2584 = vrot.slane %v2536, %v2583
        %v2585 = vmul.f32 %v2577, %v2584
        %v2586 = vmul.f32 %v2578, %v2584
        %v2587 = vmul.f32 %v2579, %v2584
        %v2588 = vmul.f32 %v2580, %v2584
        %v2589 = vlaneseq
        %v2590 = vshrl.u32 %v2589, 7
        %v2591 = vsub.s32 1, %v2590
        %v2592 = vrot.slane %v2536, %v2591
        %v2593 = vadd.f32 %v2585, %v2592
        %v2594 = vadd.f32 %v2586, %v2592
        %v2595 = vadd.f32 %v2587, %v2592
        %v2596 = vadd.f32 %v2588, %v2592
        %p2597 = scmp.eq.s32.totalorder %s31, 1
        // Predicated region
        $region93: #{model_with_intermediate_layers.1} parent=63 // pred_check
          %p2598 = pneg %p2597
        $region94: #{model_with_intermediate_layers.1} parent=63 // pred_check_branch
          %2600 = sbr.rel (%p2598) target = $region96
        $region95: #{model_with_intermediate_layers.1} parent=63 // pred_region
          %2601 = vst [vmem:[%s644] sm:$0xff] %v2593
          %2602 = vst [vmem:[%s644 + $0x8] sm:$0xff] %v2594
          %2603 = vst [vmem:[%s644 + $0x10] sm:$0xff] %v2595
          %2604 = vst [vmem:[%s644 + $0x18] sm:$0xff] %v2596
        $region96: #{model_with_intermediate_layers.1} parent=63 // pred_fallthru
          _
        %p2605 = scmp.eq.s32.totalorder %s31, 2
        // Predicated region
        $region97: #{model_with_intermediate_layers.1} parent=63 // pred_check
          %p2606 = pneg %p2605
        $region98: #{model_with_intermediate_layers.1} parent=63 // pred_check_branch
          %2608 = sbr.rel (%p2606) target = $region100
        $region99: #{model_with_intermediate_layers.1} parent=63 // pred_region
          %2609 = vst [vmem:[%s649] sm:$0xff] %v2593
          %2610 = vst [vmem:[%s649 + $0x8] sm:$0xff] %v2594
          %2611 = vst [vmem:[%s649 + $0x10] sm:$0xff] %v2595
          %2612 = vst [vmem:[%s649 + $0x18] sm:$0xff] %v2596
        $region100: #{model_with_intermediate_layers.1} parent=63 // pred_fallthru
          _
        %p2613 = scmp.lt.s32.totalorder %s30, 1
        %s2614 = scalar_select %p2613, %s30, 1
        %s2615 = smul.addr %s2614, 4
        %s2616 = smul.addr %s2615, 8
        %s2617 = scalar_lea.vmem %s11, %s2616
        %p2618 = scmp.lt.s32.totalorder %s30, 1
        %s2619 = scalar_select %p2618, %s30, 1
        %s2620 = smul.addr %s2619, 4
        %s2621 = smul.addr %s2620, 8
        %s2622 = scalar_lea.vmem %s12, %s2621
        // Predicated region
        $region101: #{model_with_intermediate_layers.1} parent=63 // pred_check
          %p2623 = pneg %p322
        $region102: #{model_with_intermediate_layers.1} parent=63 // pred_check_branch
          %2625 = sbr.rel (%p2623) target = $region104
        $region103: #{model_with_intermediate_layers.1} parent=63 // pred_region
          _
        $region104: #{model_with_intermediate_layers.1} parent=63 // pred_fallthru
          _
        // Predicated region
        $region105: #{model_with_intermediate_layers.1} parent=63 // pred_check
          %p2626 = pneg %p348
        $region106: #{model_with_intermediate_layers.1} parent=63 // pred_check_branch
          %2628 = sbr.rel (%p2626) target = $region108
        $region107: #{model_with_intermediate_layers.1} parent=63 // pred_region
          _
        $region108: #{model_with_intermediate_layers.1} parent=63 // pred_fallthru
          _
      $region64: #{model_with_intermediate_layers.1} parent=5 // pred_fallthru
        _
      %p2629 = scmp.le.s32.totalorder 2, %s21
      // Predicated region
      $region109: #{model_with_intermediate_layers.1} parent=5 // pred_check
        %p2630 = pneg %p2629
      $region110: #{model_with_intermediate_layers.1} parent=5 // pred_check_branch
        %2632 = sbr.rel (%p2630) target = $region112
      $region111: #{model_with_intermediate_layers.1} parent=5 // pred_region
        %s2633 = ssub.s32 %s21, 2
        // Predicated region
        $region113: #{model_with_intermediate_layers.1} parent=111 // pred_check
          %p2634 = pneg %p328
        $region114: #{model_with_intermediate_layers.1} parent=111 // pred_check_branch
          %2636 = sbr.rel (%p2634) target = $region116
        $region115: #{model_with_intermediate_layers.1} parent=111 // pred_region
          %p2637 = scmp.lt.s32.totalorder %s32, 1
          %s2638 = scalar_select %p2637, %s32, 1
          %s2639 = smul.addr %s2638, 4
          %s2640 = smul.addr %s2639, 8
          %s2641 = scalar_lea.vmem %s11, %s2640
        $region116: #{model_with_intermediate_layers.1} parent=111 // pred_fallthru
          _
        // Predicated region
        $region117: #{model_with_intermediate_layers.1} parent=111 // pred_check
          %p2642 = pneg %p354
        $region118: #{model_with_intermediate_layers.1} parent=111 // pred_check_branch
          %2644 = sbr.rel (%p2642) target = $region120
        $region119: #{model_with_intermediate_layers.1} parent=111 // pred_region
          %p2645 = scmp.lt.s32.totalorder %s32, 1
          %s2646 = scalar_select %p2645, %s32, 1
          %s2647 = smul.addr %s2646, 4
          %s2648 = smul.addr %s2647, 8
          %s2649 = scalar_lea.vmem %s12, %s2648
        $region120: #{model_with_intermediate_layers.1} parent=111 // pred_fallthru
          _
      $region112: #{model_with_intermediate_layers.1} parent=5 // pred_fallthru
        _
    $region6: #{model_with_intermediate_layers.1} parent=1 // loop_footer
      %s25 = sadd.s32 1, %s21
    $region7: #{model_with_intermediate_layers.1} parent=1 // loop_footer_branch
      %20 = sbr.rel target = $region3
    $region8: #{model_with_intermediate_layers.1} parent=1 // loop_exit
      _
    %2650 = vsyncpa [#allocation4], 1
    %s2651 = scalar_lea.sflag [#allocation4], 1
    %2652 = vsyncpa %s2651, 1
    %2653 = vsyncpa [#allocation6], 1

</llo_original>
